<compile_context>
chip_gen: v5e
topology: v5e:2x2
jax: 0.10.0
libtpu: 0.0.40
codegen_flags: <defaults>
</compile_context>

<pallas_src>
import functools

import jax
import jax.numpy as jnp
import numpy as np
from jax import lax
from jax.experimental import pallas as pl
from jax.experimental.pallas import tpu as pltpu


def _ceil_to(v, m):
    return -(-v // m) * m


def _svd_conv_kernel(x_ref, *rest, group_offsets, th_wp, cin, two_stage):
    """Compute one output slab of the (stride-1, possibly dilated) fused conv.

    x_ref : (Hp*Wp, Cin)        padded image, flattened row-major, VMEM resident
    w1_ref: (kh*kw*Cin, mid)    tap-major stage-1 weights (V^T diag(S) [U^T])
    w2_ref: (R_pad, Cout_pad)   stage-2 (1x1) weights -- two-stage path only
    o_ref : (th*Wp, Cout_pad)   output slab for this grid step
    """
    if two_stage:
        w1_ref, w2_ref, o_ref = rest
    else:
        w1_ref, o_ref = rest
        w2_ref = None

    base = pl.multiple_of(pl.program_id(1) * th_wp, 8)

    acc = None
    row = 0
    for offsets in group_offsets:                    # static, unrolled group loop
        if len(offsets) == 1:
            xs = x_ref[pl.ds(base + offsets[0], th_wp), :]
        else:
            # Slab-local mini-im2col: pack g contiguous tap slices into the lane
            # (contraction) dim so the MXU sees K = g*Cin instead of K = Cin.
            xs = jnp.concatenate(
                [x_ref[pl.ds(base + off, th_wp), :] for off in offsets], axis=-1)
        k = len(offsets) * cin
        contrib = jnp.dot(xs, w1_ref[row:row + k, :],
                          preferred_element_type=jnp.float32)
        acc = contrib if acc is None else acc + contrib   # register/MRB accumulation
        row += k

    if two_stage:                                    # truncated rank: 1x1 R -> Cout
        acc = jnp.dot(acc.astype(w2_ref.dtype), w2_ref[...],
                      preferred_element_type=jnp.float32)

    o_ref[...] = acc.astype(o_ref.dtype)             # single store per slab


def _vmem_capacity_bytes():
    try:
        return int(pltpu.get_tpu_info().vmem_capacity_bytes)
    except Exception:
        return 64 * 2 ** 20          # conservative fallback (v7x per-TensorCore VMEM)


@functools.partial(
    jax.jit,
    static_argnames=("kh", "kw", "stride", "padding", "dilation", "use_bf16"))
def svd_conv2d_forward(x, v_mat, s_vec, u_mat, *, kh, kw,
                       stride=(1, 1), padding=(0, 0), dilation=(1, 1),
                       use_bf16=False):
    """x: (N,Cin,H,W) NCHW; v_mat: (R, Cin*kh*kw); s_vec: (R,); u_mat: (Cout, R).

    Returns float32 (N, Cout, Ho, Wo) matching the PyTorch module's forward.
    """
    n, cin, h, w = x.shape
    cout = int(u_mat.shape[0])
    r = int(s_vec.shape[0])
    sh, sw = stride
    ph, pw = padding
    dh, dw = dilation

    compute_dtype = jnp.bfloat16 if use_bf16 else jnp.float32
    in_bytes = 2 if use_bf16 else 4
    k_tot = cin * kh * kw

    # Collapsed (single matmul) only when it does not cost extra FLOPs vs two-stage.
    two_stage = (k_tot * r + r * cout) < (k_tot * cout)

    cout_pad = _ceil_to(cout, 128)                 # lane-dense output
    r_pad = _ceil_to(r, 8)
    mid = r_pad if two_stage else cout_pad

    # ---- weights: fold S into V, tap-major (kh, kw, cin) row ordering ----
    w1 = (v_mat.T * s_vec[None, :]).astype(jnp.float32)               # (K_tot, R)
    if not two_stage:
        w1 = jnp.matmul(w1, u_mat.T.astype(jnp.float32),
                        precision=lax.Precision.HIGHEST)              # (K_tot, Cout)
    w1 = (w1.reshape(cin, kh, kw, -1).transpose(1, 2, 0, 3)
          .reshape(kh * kw * cin, -1))
    w1 = jnp.pad(w1, ((0, 0), (0, mid - w1.shape[1]))).astype(compute_dtype)
    if two_stage:
        w2 = jnp.pad(u_mat.T.astype(jnp.float32),
                     ((0, r_pad - r), (0, cout_pad - cout))).astype(compute_dtype)

    # ---- spatial layout: padded width rounded up to a multiple of 8 ----
    wp = _ceil_to(w + 2 * pw, 8)
    ho1 = h + 2 * ph - dh * (kh - 1)               # stride-1 output height
    wo1 = w + 2 * pw - dw * (kw - 1)               # stride-1 output width

    # tap offsets in the flattened (Hp*Wp) axis; tap t = di*kw + dj
    tap_off = [di * dh * wp + dj * dw for di in range(kh) for dj in range(kw)]
    # group taps so each dot has K = g*Cin ~ 256
    g = max(1, min(kh * kw, 256 // max(cin, 1)))
    group_offsets = tuple(tuple(tap_off[s:s + g]) for s in range(0, kh * kw, g))
    max_g = max(len(go) for go in group_offsets)

    # ---- output slab size: big tiles, >=2 grid units, fit per-generation VMEM ----
    vmem_budget = int(_vmem_capacity_bytes() * 0.85)

    def _plan(th_):
        n_hb_ = -(-ho1 // th_)
        ho_pad_ = n_hb_ * th_
        hp_eff_ = ho_pad_ + dh * (kh - 1) + 1      # +1 row: last tap slice in bounds
        return n_hb_, ho_pad_, hp_eff_

    def _vmem_need(th_):
        _, _, hp_eff_ = _plan(th_)
        th_wp_ = th_ * wp
        x_b = _ceil_to(hp_eff_ * wp, 8) * _ceil_to(cin, 128) * in_bytes
        w1_b = _ceil_to(kh * kw * cin, 8) * _ceil_to(mid, 128) * in_bytes
        w2_b = (_ceil_to(r_pad, 8) * cout_pad * in_bytes) if two_stage else 0
        o_b = th_wp_ * cout_pad * 4
        stage_b = th_wp_ * _ceil_to(max_g * cin, 128) * in_bytes      # concat temp
        acc_b = th_wp_ * _ceil_to(mid, 128) * 4                       # f32 accumulator
        return 2 * (x_b + w1_b + w2_b + o_b) + stage_b + acc_b

    th = max(1, min(ho1, 4096 // wp))              # ~4096 flattened rows per slab
    if n == 1 and ho1 >= 2:
        th = min(th, -(-ho1 // 2))                 # >=2 slabs so both v7x TCs get work
    while th > 1 and _vmem_need(th) > vmem_budget:
        th = max(1, th // 2)
    n_hb, ho_pad, hp_eff = _plan(th)
    th_wp = th * wp
    vmem_limit = int(min(vmem_budget,
                         max(16 * 2 ** 20, int(_vmem_need(th) * 1.25) + (4 << 20))))

    # ---- input: NCHW -> NHWC, zero-pad, flatten (Hp*Wp) row-major ----
    extra_h = hp_eff - (h + 2 * ph)
    extra_w = wp - (w + 2 * pw)
    x_nhwc = jnp.transpose(x, (0, 2, 3, 1)).astype(compute_dtype)
    x_pad = jnp.pad(x_nhwc, ((0, 0), (ph, ph + extra_h), (pw, pw + extra_w), (0, 0)))
    x_flat = x_pad.reshape(n, hp_eff * wp, cin)

    kernel = functools.partial(_svd_conv_kernel, group_offsets=group_offsets,
                               th_wp=th_wp, cin=cin, two_stage=two_stage)

    in_specs = [
        # whole flattened padded image; resident across the slab axis
        pl.BlockSpec((None, hp_eff * wp, cin), lambda b, i: (b, 0, 0)),
        # stage-1 weights; resident across the whole grid
        pl.BlockSpec((kh * kw * cin, mid), lambda b, i: (0, 0)),
    ]
    operands = [x_flat, w1]
    if two_stage:
        in_specs.append(pl.BlockSpec((r_pad, cout_pad), lambda b, i: (0, 0)))
        operands.append(w2)

    out_flat = pl.pallas_call(
        kernel,
        out_shape=jax.ShapeDtypeStruct((n, ho_pad * wp, cout_pad), jnp.float32),
        grid_spec=pltpu.PrefetchScalarGridSpec(
            num_scalar_prefetch=0,
            grid=(n, n_hb),
            in_specs=in_specs,
            out_specs=pl.BlockSpec((None, th_wp, cout_pad), lambda b, i: (b, i, 0)),
        ),
        compiler_params=pltpu.CompilerParams(
            dimension_semantics=("parallel", "parallel"),
            vmem_limit_bytes=vmem_limit),
    )(*operands)

    # Drop over-computed rows/cols and the Cout lane padding, handle stride, -> NCHW.
    out = out_flat.reshape(n, ho_pad, wp, cout_pad)[:, :ho1, :wo1, :cout]
    if sh != 1 or sw != 1:
        # TODO(synk): gather strided rows in-kernel instead of subsampling here.
        out = out[:, ::sh, ::sw, :]
    return jnp.transpose(out, (0, 3, 1, 2))


def _reference_forward(x, v_data, s_vec, u_data, stride, padding, dilation):
    """Pure-JAX NCHW reference mirroring the PyTorch module."""
    y = lax.conv_general_dilated(
        x, v_data, window_strides=stride,
        padding=[(padding[0],) * 2, (padding[1],) * 2],
        rhs_dilation=dilation,
        dimension_numbers=("NCHW", "OIHW", "NCHW"),
        precision=lax.Precision.HIGHEST)
    y = y * s_vec.reshape(1, -1, 1, 1)
    y = lax.conv_general_dilated(
        y, u_data, window_strides=(1, 1), padding=[(0, 0), (0, 0)],
        dimension_numbers=("NCHW", "OIHW", "NCHW"),
        precision=lax.Precision.HIGHEST)
    return y


def _make_svd_factors(key, cout, cin, kh, kw, rank):
    old_weight = jax.random.normal(key, (cout, cin, kh, kw), dtype=jnp.float32)
    matrix = np.asarray(old_weight).reshape(cout, -1)
    U, S, Vt = np.linalg.svd(matrix, full_matrices=False)
    U, S, Vt = U[:, :rank], S[:rank], Vt[:rank, :]
    u_mat = jnp.asarray(U, dtype=jnp.float32)        # (Cout, R)        == U_data
    s_vec = jnp.asarray(S, dtype=jnp.float32)        # (R,)             == vector_S
    v_mat = jnp.asarray(Vt, dtype=jnp.float32)       # (R, Cin*kh*kw)   == V_data
    return u_mat, s_vec, v_mat


if __name__ == "__main__":
    N, Cin, H, W = 2, 4, 16, 16
    Cout, kh, kw = 8, 3, 3
    padding, dilation = (1, 1), (1, 1)

    key = jax.random.PRNGKey(0)
    k_w, k_x = jax.random.split(key)
    x = jax.random.normal(k_x, (N, Cin, H, W), dtype=jnp.float32)

    # --- case 1: full rank (rank_frac=1) -> collapsed single-matmul path, f32 ---
    rank = min(Cout, Cin * kh * kw)
    u_mat, s_vec, v_mat = _make_svd_factors(k_w, Cout, Cin, kh, kw, rank)
    out = jax.block_until_ready(svd_conv2d_forward(
        x, v_mat, s_vec, u_mat, kh=kh, kw=kw,
        stride=(1, 1), padding=padding, dilation=dilation))
    ref = jax.block_until_ready(_reference_forward(
        x, v_mat.reshape(rank, Cin, kh, kw), s_vec, u_mat.reshape(Cout, rank, 1, 1),
        (1, 1), padding, dilation))
    assert out.shape == (N, Cout, H, W), out.shape
    np.testing.assert_allclose(np.asarray(out), np.asarray(ref), rtol=5e-4, atol=5e-4)

    # --- case 2: truncated rank -> two-stage (tap-conv -> R -> 1x1) path, stride 2 ---
    rank2 = 3
    u2, s2, v2 = _make_svd_factors(k_w, Cout, Cin, kh, kw, rank2)
    out2 = jax.block_until_ready(svd_conv2d_forward(
        x, v2, s2, u2, kh=kh, kw=kw,
        stride=(2, 2), padding=padding, dilation=dilation))
    ref2 = jax.block_until_ready(_reference_forward(
        x, v2.reshape(rank2, Cin, kh, kw), s2, u2.reshape(Cout, rank2, 1, 1),
        (2, 2), padding, dilation))
    assert out2.shape == (N, Cout, 8, 8), out2.shape
    np.testing.assert_allclose(np.asarray(out2), np.asarray(ref2), rtol=5e-4, atol=5e-4)

    # --- case 3: bf16 input/weight path (f32 accumulation), loose tolerance ---
    out3 = jax.block_until_ready(svd_conv2d_forward(
        x, v_mat, s_vec, u_mat, kh=kh, kw=kw,
        stride=(1, 1), padding=padding, dilation=dilation, use_bf16=True))
    np.testing.assert_allclose(np.asarray(out3), np.asarray(ref), rtol=5e-2, atol=1e-1)

    print("KERNEL_OK")
</pallas_src>

<mosaic_0001>
module attributes {stable_mosaic.version = 11 : i64} {
  func.func @_svd_conv_kernel(%arg0: i32, %arg1: i32, %arg2: memref<1x456x4xf32, #tpu.memory_space<vmem>>, %arg3: memref<36x128xf32, #tpu.memory_space<vmem>>, %arg4: memref<1x384x128xf32, #tpu.memory_space<vmem>>) attributes {dimension_semantics = [#tpu.dimension_semantics<parallel>, #tpu.dimension_semantics<parallel>], iteration_bounds = array<i64: 2, 1>, scalar_prefetch = 0 : i64, scratch_operands = 0 : i64, tpu.core_type = #tpu.core_type<tc>, window_params = [{transform_indices = @transform_0, window_bounds = array<i64: 1, 456, 4>}, {pipeline_mode = #tpu.pipeline_mode<synchronous>, transform_indices = @transform_1, window_bounds = array<i64: 36, 128>}, {transform_indices = @transform_2, window_bounds = array<i64: 1, 384, 128>}]} {
    %c384_i32 = arith.constant 384 : i32
    %0 = arith.muli %arg1, %c384_i32 : i32
    %1 = tpu.assume_multiple %0, 8 : i32
    %c0_i32 = arith.constant 0 : i32
    %2 = arith.addi %1, %c0_i32 : i32
    %c0 = arith.constant 0 : index
    %3 = arith.index_cast %2 : i32 to index
    %c0_0 = arith.constant 0 : index
    %4 = vector.load %arg2[%c0, %3, %c0_0] : memref<1x456x4xf32, #tpu.memory_space<vmem>>, vector<1x384x4xf32>
    %5 = vector.shape_cast %4 : vector<1x384x4xf32> to vector<384x4xf32>
    %c1_i32 = arith.constant 1 : i32
    %6 = arith.addi %1, %c1_i32 : i32
    %c0_1 = arith.constant 0 : index
    %7 = arith.index_cast %6 : i32 to index
    %c0_2 = arith.constant 0 : index
    %8 = vector.load %arg2[%c0_1, %7, %c0_2] : memref<1x456x4xf32, #tpu.memory_space<vmem>>, vector<1x384x4xf32>
    %9 = vector.shape_cast %8 : vector<1x384x4xf32> to vector<384x4xf32>
    %c2_i32 = arith.constant 2 : i32
    %10 = arith.addi %1, %c2_i32 : i32
    %c0_3 = arith.constant 0 : index
    %11 = arith.index_cast %10 : i32 to index
    %c0_4 = arith.constant 0 : index
    %12 = vector.load %arg2[%c0_3, %11, %c0_4] : memref<1x456x4xf32, #tpu.memory_space<vmem>>, vector<1x384x4xf32>
    %13 = vector.shape_cast %12 : vector<1x384x4xf32> to vector<384x4xf32>
    %c24_i32 = arith.constant 24 : i32
    %14 = arith.addi %1, %c24_i32 : i32
    %c0_5 = arith.constant 0 : index
    %15 = arith.index_cast %14 : i32 to index
    %c0_6 = arith.constant 0 : index
    %16 = vector.load %arg2[%c0_5, %15, %c0_6] : memref<1x456x4xf32, #tpu.memory_space<vmem>>, vector<1x384x4xf32>
    %17 = vector.shape_cast %16 : vector<1x384x4xf32> to vector<384x4xf32>
    %c25_i32 = arith.constant 25 : i32
    %18 = arith.addi %1, %c25_i32 : i32
    %c0_7 = arith.constant 0 : index
    %19 = arith.index_cast %18 : i32 to index
    %c0_8 = arith.constant 0 : index
    %20 = vector.load %arg2[%c0_7, %19, %c0_8] : memref<1x456x4xf32, #tpu.memory_space<vmem>>, vector<1x384x4xf32>
    %21 = vector.shape_cast %20 : vector<1x384x4xf32> to vector<384x4xf32>
    %c26_i32 = arith.constant 26 : i32
    %22 = arith.addi %1, %c26_i32 : i32
    %c0_9 = arith.constant 0 : index
    %23 = arith.index_cast %22 : i32 to index
    %c0_10 = arith.constant 0 : index
    %24 = vector.load %arg2[%c0_9, %23, %c0_10] : memref<1x456x4xf32, #tpu.memory_space<vmem>>, vector<1x384x4xf32>
    %25 = vector.shape_cast %24 : vector<1x384x4xf32> to vector<384x4xf32>
    %c48_i32 = arith.constant 48 : i32
    %26 = arith.addi %1, %c48_i32 : i32
    %c0_11 = arith.constant 0 : index
    %27 = arith.index_cast %26 : i32 to index
    %c0_12 = arith.constant 0 : index
    %28 = vector.load %arg2[%c0_11, %27, %c0_12] : memref<1x456x4xf32, #tpu.memory_space<vmem>>, vector<1x384x4xf32>
    %29 = vector.shape_cast %28 : vector<1x384x4xf32> to vector<384x4xf32>
    %c49_i32 = arith.constant 49 : i32
    %30 = arith.addi %1, %c49_i32 : i32
    %c0_13 = arith.constant 0 : index
    %31 = arith.index_cast %30 : i32 to index
    %c0_14 = arith.constant 0 : index
    %32 = vector.load %arg2[%c0_13, %31, %c0_14] : memref<1x456x4xf32, #tpu.memory_space<vmem>>, vector<1x384x4xf32>
    %33 = vector.shape_cast %32 : vector<1x384x4xf32> to vector<384x4xf32>
    %c50_i32 = arith.constant 50 : i32
    %34 = arith.addi %1, %c50_i32 : i32
    %c0_15 = arith.constant 0 : index
    %35 = arith.index_cast %34 : i32 to index
    %c0_16 = arith.constant 0 : index
    %36 = vector.load %arg2[%c0_15, %35, %c0_16] : memref<1x456x4xf32, #tpu.memory_space<vmem>>, vector<1x384x4xf32>
    %37 = vector.shape_cast %36 : vector<1x384x4xf32> to vector<384x4xf32>
    %38 = tpu.concatenate %5, %9, %13, %17, %21, %25, %29, %33, %37 in 1 : vector<384x4xf32>, vector<384x4xf32>, vector<384x4xf32>, vector<384x4xf32>, vector<384x4xf32>, vector<384x4xf32>, vector<384x4xf32>, vector<384x4xf32>, vector<384x4xf32> -> vector<384x36xf32>
    %c0_17 = arith.constant 0 : index
    %c0_18 = arith.constant 0 : index
    %39 = vector.load %arg3[%c0_17, %c0_18] : memref<36x128xf32, #tpu.memory_space<vmem>>, vector<36x128xf32>
    %cst = arith.constant dense<0.000000e+00> : vector<384x128xf32>
    %40 = tpu.matmul %38, %39, %cst {dimension_numbers = #tpu.dot_dimension_numbers<[1], [0], [0], [1], [0, 0, 1, 1], [], []>} : vector<384x36xf32>, vector<36x128xf32>, vector<384x128xf32> -> vector<384x128xf32>
    %c0_19 = arith.constant 0 : index
    %c0_20 = arith.constant 0 : index
    %c0_21 = arith.constant 0 : index
    %41 = vector.load %arg4[%c0_19, %c0_20, %c0_21] : memref<1x384x128xf32, #tpu.memory_space<vmem>>, vector<1x384x128xf32>
    %42 = vector.shape_cast %41 : vector<1x384x128xf32> to vector<384x128xf32>
    %43 = vector.shape_cast %40 : vector<384x128xf32> to vector<1x384x128xf32>
    tpu.vector_store %arg4[%c0_19, %c0_20, %c0_21], %43 {strides = array<i32>} : memref<1x384x128xf32, #tpu.memory_space<vmem>>, vector<1x384x128xf32>,
    return
  }
  func.func @transform_0(%arg0: i32, %arg1: i32) -> (i32, i32, i32) {
    %c0_i32 = arith.constant 0 : i32
    %c0_i32_0 = arith.constant 0 : i32
    %c0_i32_1 = arith.constant 0 : i32
    return %arg0, %c0_i32, %c0_i32_0 : i32, i32, i32
  }
  func.func @transform_1(%arg0: i32, %arg1: i32) -> (i32, i32) {
    %c0_i32 = arith.constant 0 : i32
    %c0_i32_0 = arith.constant 0 : i32
    %c0_i32_1 = arith.constant 0 : i32
    return %c0_i32, %c0_i32_0 : i32, i32
  }
  func.func @transform_2(%arg0: i32, %arg1: i32) -> (i32, i32, i32) {
    %c0_i32 = arith.constant 0 : i32
    %c0_i32_0 = arith.constant 0 : i32
    return %arg0, %arg1, %c0_i32 : i32, i32, i32
  }
}

</mosaic_0001>

<llo_original>
// kernel: svd_conv2d_forward.1
$region0: #{svd_conv2d_forward.1}
  #allocation0 [shape = 'u32[]', space=smem, size = 0x4, offset = 0x4, fixed_abs, tag = 'smem constant byte address 0x4 - core index']
  #allocation1 [shape = 'u32[72,128]{1,0:T(1,128)}', space=vmem, size = 0x9000, scoped, tag = 'internal scratch']
  %s0 = inlined_call_operand.vmem [shape: f32[2,456,4], index: 0, kind: input, shape index: {}]
  %s1 = inlined_call_operand.vmem [shape: f32[36,128], index: 1, kind: input, shape index: {}]
  %s2 = inlined_call_operand.vmem [shape: f32[2,384,128], index: 2, kind: output, shape index: {}]
  %s3 = sld [smem:[#allocation0]]
  $region41: #{svd_conv2d_forward.1} parent=0
    _
  %s5 = ssub.s32 1, %s3
  %s6 = scalar_select 0, %s5, %s3
  loop: start=0, step=1, limit=4
  $region2: #{svd_conv2d_forward.1} parent=0 // loop_pre_header
    _
  $region3: #{svd_conv2d_forward.1} parent=0 // loop_header
    %s8 = sphi 0, %s12
    %p9 = scmp.ge.s32.totalorder %s8, 4
    %s15 = sphi 0, %s27
    %s16 = sphi 0, %s23
    %s17 = sphi 0, %s15
    %s18 = sphi 0, %s16
    %s19 = sphi 0, %s17
    %s20 = sphi 0, %s18
    %s30 = sphi 0, %s32
    %s33 = sphi 0, %s30
    %s34 = sphi 0, %s33
    %s50 = sphi 0, %s34
    %s54 = sphi 0, %s54
    %s56 = sphi 0, %s54
    %s57 = sphi 0, %s56
    %s71 = sphi 0, %s57
    %s79 = sphi 0, %s81
    %s82 = sphi 0, %s79
    %s83 = sphi 0, %s82
    %s99 = sphi 0, %s83
  $region4: #{svd_conv2d_forward.1} parent=0 // loop_header_branch
    %11 = sbr.rel (%p9) target = $region8
  $region5: #{svd_conv2d_forward.1} parent=0 // loop_body
    %s13 = ssub.s32 %s8, 1
    %s14 = ssub.s32 %s8, 2
    %s21 = sadd.s32 1, %s16
    %p22 = scmp.ge.s32.totalorder %s21, 1
    %s23 = scalar_select %p22, 0, %s21
    %s24 = sadd.s32 1, %s15
    %s25 = scalar_select %p22, %s24, %s15
    %p26 = scmp.ge.s32.totalorder %s25, 2
    %s27 = scalar_select %p26, 0, %s25
    %s28 = ssub.s32 %s15, %s27
    %p29 = scmp.eq.s32.totalorder %s28, 0
    %s31 = sadd.s32 %s30, 1
    %s32 = scalar_select %p29, %s30, %s31
    %p35 = pneg %p29
    %p36 = scmp.eq.s32.totalorder %s8, 1
    %p37 = por %p35, %p36
    %p38 = scmp.ne.s32.totalorder %s30, %s33
    %p39 = scmp.eq.s32.totalorder %s8, 0
    %p40 = por %p38, %p39
    %p41 = scmp.ne.s32.totalorder %s30, %s33
    %p42 = scmp.eq.s32.totalorder %s13, 1
    %p43 = por %p41, %p42
    %p44 = scmp.ne.s32.totalorder %s33, %s34
    %p45 = scmp.eq.s32.totalorder %s13, 0
    %p46 = por %p44, %p45
    %p47 = scmp.ne.s32.totalorder %s33, %s34
    %p48 = scmp.eq.s32.totalorder %s14, 1
    %p49 = por %p47, %p48
    %p51 = scmp.ne.s32.totalorder %s34, %s50
    %p52 = scmp.eq.s32.totalorder %s14, 0
    %p53 = por %p51, %p52
    %s55 = sadd.s32 %s54, 1
    %p58 = scmp.eq.s32.totalorder %s8, 1
    %p59 = scmp.ne.s32.totalorder %s54, %s56
    %p60 = scmp.eq.s32.totalorder %s8, 0
    %p61 = por %p59, %p60
    %p62 = scmp.ne.s32.totalorder %s54, %s56
    %p63 = scmp.eq.s32.totalorder %s13, 1
    %p64 = por %p62, %p63
    %p65 = scmp.ne.s32.totalorder %s56, %s57
    %p66 = scmp.eq.s32.totalorder %s13, 0
    %p67 = por %p65, %p66
    %p68 = scmp.ne.s32.totalorder %s56, %s57
    %p69 = scmp.eq.s32.totalorder %s14, 1
    %p70 = por %p68, %p69
    %p72 = scmp.ne.s32.totalorder %s57, %s71
    %p73 = scmp.eq.s32.totalorder %s14, 0
    %p74 = por %p72, %p73
    %s75 = ssub.s32 %s15, %s27
    %s76 = ssub.s32 %s16, %s23
    %s77 = sor.u32 %s75, %s76
    %p78 = scmp.eq.s32.totalorder %s77, 0
    %s80 = sadd.s32 %s79, 1
    %s81 = scalar_select %p78, %s79, %s80
    %p84 = pneg %p78
    %p85 = scmp.eq.s32.totalorder %s8, 1
    %p86 = por %p84, %p85
    %p87 = scmp.ne.s32.totalorder %s79, %s82
    %p88 = scmp.eq.s32.totalorder %s8, 0
    %p89 = por %p87, %p88
    %p90 = scmp.ne.s32.totalorder %s79, %s82
    %p91 = scmp.eq.s32.totalorder %s13, 1
    %p92 = por %p90, %p91
    %p93 = scmp.ne.s32.totalorder %s82, %s83
    %p94 = scmp.eq.s32.totalorder %s13, 0
    %p95 = por %p93, %p94
    %p96 = scmp.ne.s32.totalorder %s82, %s83
    %p97 = scmp.eq.s32.totalorder %s14, 1
    %p98 = por %p96, %p97
    %p100 = scmp.ne.s32.totalorder %s83, %s99
    %p101 = scmp.eq.s32.totalorder %s14, 0
    %p102 = por %p100, %p101
    %p103 = scmp.le.s32.totalorder 1, %s8
    %p104 = scmp.lt.s32.totalorder %s8, 3
    %p105 = pnand %p103, %p104
    %p106 = pneg %p105
    // Predicated region
    $region9: #{svd_conv2d_forward.1} parent=5 // pred_check
      _
    $region10: #{svd_conv2d_forward.1} parent=5 // pred_check_branch
      %108 = sbr.rel (%p105) target = $region12
    $region11: #{svd_conv2d_forward.1} parent=5 // pred_region
      %s109 = ssub.s32 %s8, 1
      // Predicated region
      $region13: #{svd_conv2d_forward.1} parent=11 // pred_check
        %p110 = pneg %p67
      $region14: #{svd_conv2d_forward.1} parent=11 // pred_check_branch
        %112 = sbr.rel (%p110) target = $region16
      $region15: #{svd_conv2d_forward.1} parent=11 // pred_region
        _
      $region16: #{svd_conv2d_forward.1} parent=11 // pred_fallthru
        _
    $region12: #{svd_conv2d_forward.1} parent=5 // pred_fallthru
      _
    %p113 = scmp.lt.s32.totalorder %s8, 2
    // Predicated region
    $region17: #{svd_conv2d_forward.1} parent=5 // pred_check
      %p114 = pneg %p113
    $region18: #{svd_conv2d_forward.1} parent=5 // pred_check_branch
      %116 = sbr.rel (%p114) target = $region20
    $region19: #{svd_conv2d_forward.1} parent=5 // pred_region
      // Predicated region
      $region21: #{svd_conv2d_forward.1} parent=19 // pred_check
        %p117 = pneg %p40
      $region22: #{svd_conv2d_forward.1} parent=19 // pred_check_branch
        %119 = sbr.rel (%p117) target = $region24
      $region23: #{svd_conv2d_forward.1} parent=19 // pred_region
        %p120 = scmp.lt.s32.totalorder %s15, 1
        %s121 = scalar_select %p120, %s15, 1
        %s122 = smul.addr %s121, 57
        %s123 = smul.addr %s122, 8
        %s124 = scalar_lea.vmem %s0, %s123
      $region24: #{svd_conv2d_forward.1} parent=19 // pred_fallthru
        _
    $region20: #{svd_conv2d_forward.1} parent=5 // pred_fallthru
      _
    %p125 = scmp.le.s32.totalorder 1, %s8
    %p126 = scmp.lt.s32.totalorder %s8, 3
    %p127 = pnand %p125, %p126
    %p128 = pneg %p127
    // Predicated region
    $region25: #{svd_conv2d_forward.1} parent=5 // pred_check
      _
    $region26: #{svd_conv2d_forward.1} parent=5 // pred_check_branch
      %130 = sbr.rel (%p127) target = $region28
    $region27: #{svd_conv2d_forward.1} parent=5 // pred_region
      %s131 = ssub.s32 %s8, 1
      %p132 = scmp.lt.s32.totalorder %s17, 1
      %s133 = scalar_select %p132, %s17, 1
      %s134 = smul.addr %s133, 57
      %s135 = smul.addr %s134, 8
      %s136 = scalar_lea.vmem %s0, %s135
      %p137 = pneg %p46
      %p138 = pneg %p43
      %p139 = pneg %p67
      %p140 = pneg %p64
      %p141 = pneg %p95
      %p142 = pneg %p92
      %s143 = smul.u32 48, %s18
      %p144 = scmp.lt.s32.totalorder %s17, 1
      %s145 = scalar_select %p144, %s17, 1
      %p146 = scmp.lt.s32.totalorder %s143, 47
      %s147 = scalar_select %p146, %s143, 47
      %s148 = smul.addr %s145, 48
      %s149 = sadd.s32 %s147, %s148
      %s150 = smul.addr %s149, 8
      %s151 = scalar_lea.vmem %s2, %s150
      %p152 = scmp.lt.s32.totalorder %s17, 1
      %s153 = scalar_select %p152, %s17, 1
      %s154 = smul.addr %s153, 57
      %s155 = smul.addr %s154, 8
      %s156 = scalar_lea.vmem %s0, %s155
      %s157 = smul.u32 48, %s18
      %p158 = scmp.lt.s32.totalorder %s17, 1
      %s159 = scalar_select %p158, %s17, 1
      %p160 = scmp.lt.s32.totalorder %s157, 47
      %s161 = scalar_select %p160, %s157, 47
      %s162 = smul.addr %s159, 48
      %s163 = sadd.s32 %s161, %s162
      %s164 = smul.addr %s163, 8
      %s165 = scalar_lea.vmem %s2, %s164
      %s166 = smul.u32 48, %s18
      %s167 = smul.u32 %s18, 384
      %s168 = scalar_lea.vmem %s156, %s167
      %v169 = vld [vmem:[%s168] sm:$0xff]
      %v170 = vld [vmem:[%s168 + $0x8] sm:$0xff]
      %v171 = vld [vmem:[%s168 + $0x10] sm:$0xff]
      %v172 = vld [vmem:[%s168 + $0x18] sm:$0xff]
      %v173 = vld [vmem:[%s168 + $0x20] sm:$0xff]
      %v174 = vld [vmem:[%s168 + $0x28] sm:$0xff]
      %v175 = vld [vmem:[%s168 + $0x30] sm:$0xff]
      %v176 = vld [vmem:[%s168 + $0x38] sm:$0xff]
      %v177 = vld [vmem:[%s168 + $0x40] sm:$0xff]
      %v178 = vld [vmem:[%s168 + $0x48] sm:$0xff]
      %v179 = vld [vmem:[%s168 + $0x50] sm:$0xff]
      %v180 = vld [vmem:[%s168 + $0x58] sm:$0xff]
      %v181 = vld [vmem:[%s168 + $0x60] sm:$0xff]
      %v182 = vld [vmem:[%s168 + $0x68] sm:$0xff]
      %v183 = vld [vmem:[%s168 + $0x70] sm:$0xff]
      %v184 = vld [vmem:[%s168 + $0x78] sm:$0xff]
      %v185 = vld [vmem:[%s168 + $0x80] sm:$0xff]
      %v186 = vld [vmem:[%s168 + $0x88] sm:$0xff]
      %v187 = vld [vmem:[%s168 + $0x90] sm:$0xff]
      %v188 = vld [vmem:[%s168 + $0x98] sm:$0xff]
      %v189 = vld [vmem:[%s168 + $0xa0] sm:$0xff]
      %v190 = vld [vmem:[%s168 + $0xa8] sm:$0xff]
      %v191 = vld [vmem:[%s168 + $0xb0] sm:$0xff]
      %v192 = vld [vmem:[%s168 + $0xb8] sm:$0xff]
      %v193 = vld [vmem:[%s168 + $0xc0] sm:$0xff]
      %v194 = vld [vmem:[%s168 + $0xc8] sm:$0xff]
      %v195 = vld [vmem:[%s168 + $0xd0] sm:$0xff]
      %v196 = vld [vmem:[%s168 + $0xd8] sm:$0xff]
      %v197 = vld [vmem:[%s168 + $0xe0] sm:$0xff]
      %v198 = vld [vmem:[%s168 + $0xe8] sm:$0xff]
      %v199 = vld [vmem:[%s168 + $0xf0] sm:$0xff]
      %v200 = vld [vmem:[%s168 + $0xf8] sm:$0xff]
      %v201 = vld [vmem:[%s168 + $0x100] sm:$0xff]
      %v202 = vld [vmem:[%s168 + $0x108] sm:$0xff]
      %v203 = vld [vmem:[%s168 + $0x110] sm:$0xff]
      %v204 = vld [vmem:[%s168 + $0x118] sm:$0xff]
      %v205 = vld [vmem:[%s168 + $0x120] sm:$0xff]
      %v206 = vld [vmem:[%s168 + $0x128] sm:$0xff]
      %v207 = vld [vmem:[%s168 + $0x130] sm:$0xff]
      %v208 = vld [vmem:[%s168 + $0x138] sm:$0xff]
      %v209 = vld [vmem:[%s168 + $0x140] sm:$0xff]
      %v210 = vld [vmem:[%s168 + $0x148] sm:$0xff]
      %v211 = vld [vmem:[%s168 + $0x150] sm:$0xff]
      %v212 = vld [vmem:[%s168 + $0x158] sm:$0xff]
      %v213 = vld [vmem:[%s168 + $0x160] sm:$0xff]
      %v214 = vld [vmem:[%s168 + $0x168] sm:$0xff]
      %v215 = vld [vmem:[%s168 + $0x170] sm:$0xff]
      %v216 = vld [vmem:[%s168 + $0x178] sm:$0xff]
      %s217 = sadd.s32 %s167, 1
      %s218 = scalar_lea.vmem %s156, %s217
      %v219 = vld [vmem:[%s218] sm:$0xff]
      %v220 = vld [vmem:[%s218 + $0x8] sm:$0xff]
      %v221 = vld [vmem:[%s218 + $0x10] sm:$0xff]
      %v222 = vld [vmem:[%s218 + $0x18] sm:$0xff]
      %v223 = vld [vmem:[%s218 + $0x20] sm:$0xff]
      %v224 = vld [vmem:[%s218 + $0x28] sm:$0xff]
      %v225 = vld [vmem:[%s218 + $0x30] sm:$0xff]
      %v226 = vld [vmem:[%s218 + $0x38] sm:$0xff]
      %v227 = vld [vmem:[%s218 + $0x40] sm:$0xff]
      %v228 = vld [vmem:[%s218 + $0x48] sm:$0xff]
      %v229 = vld [vmem:[%s218 + $0x50] sm:$0xff]
      %v230 = vld [vmem:[%s218 + $0x58] sm:$0xff]
      %v231 = vld [vmem:[%s218 + $0x60] sm:$0xff]
      %v232 = vld [vmem:[%s218 + $0x68] sm:$0xff]
      %v233 = vld [vmem:[%s218 + $0x70] sm:$0xff]
      %v234 = vld [vmem:[%s218 + $0x78] sm:$0xff]
      %v235 = vld [vmem:[%s218 + $0x80] sm:$0xff]
      %v236 = vld [vmem:[%s218 + $0x88] sm:$0xff]
      %v237 = vld [vmem:[%s218 + $0x90] sm:$0xff]
      %v238 = vld [vmem:[%s218 + $0x98] sm:$0xff]
      %v239 = vld [vmem:[%s218 + $0xa0] sm:$0xff]
      %v240 = vld [vmem:[%s218 + $0xa8] sm:$0xff]
      %v241 = vld [vmem:[%s218 + $0xb0] sm:$0xff]
      %v242 = vld [vmem:[%s218 + $0xb8] sm:$0xff]
      %v243 = vld [vmem:[%s218 + $0xc0] sm:$0xff]
      %v244 = vld [vmem:[%s218 + $0xc8] sm:$0xff]
      %v245 = vld [vmem:[%s218 + $0xd0] sm:$0xff]
      %v246 = vld [vmem:[%s218 + $0xd8] sm:$0xff]
      %v247 = vld [vmem:[%s218 + $0xe0] sm:$0xff]
      %v248 = vld [vmem:[%s218 + $0xe8] sm:$0xff]
      %v249 = vld [vmem:[%s218 + $0xf0] sm:$0xff]
      %v250 = vld [vmem:[%s218 + $0xf8] sm:$0xff]
      %v251 = vld [vmem:[%s218 + $0x100] sm:$0xff]
      %v252 = vld [vmem:[%s218 + $0x108] sm:$0xff]
      %v253 = vld [vmem:[%s218 + $0x110] sm:$0xff]
      %v254 = vld [vmem:[%s218 + $0x118] sm:$0xff]
      %v255 = vld [vmem:[%s218 + $0x120] sm:$0xff]
      %v256 = vld [vmem:[%s218 + $0x128] sm:$0xff]
      %v257 = vld [vmem:[%s218 + $0x130] sm:$0xff]
      %v258 = vld [vmem:[%s218 + $0x138] sm:$0xff]
      %v259 = vld [vmem:[%s218 + $0x140] sm:$0xff]
      %v260 = vld [vmem:[%s218 + $0x148] sm:$0xff]
      %v261 = vld [vmem:[%s218 + $0x150] sm:$0xff]
      %v262 = vld [vmem:[%s218 + $0x158] sm:$0xff]
      %v263 = vld [vmem:[%s218 + $0x160] sm:$0xff]
      %v264 = vld [vmem:[%s218 + $0x168] sm:$0xff]
      %v265 = vld [vmem:[%s218 + $0x170] sm:$0xff]
      %v266 = vld [vmem:[%s218 + $0x178] sm:$0xff]
      %s267 = sadd.s32 %s167, 2
      %s268 = scalar_lea.vmem %s156, %s267
      %v269 = vld [vmem:[%s268] sm:$0xff]
      %v270 = vld [vmem:[%s268 + $0x8] sm:$0xff]
      %v271 = vld [vmem:[%s268 + $0x10] sm:$0xff]
      %v272 = vld [vmem:[%s268 + $0x18] sm:$0xff]
      %v273 = vld [vmem:[%s268 + $0x20] sm:$0xff]
      %v274 = vld [vmem:[%s268 + $0x28] sm:$0xff]
      %v275 = vld [vmem:[%s268 + $0x30] sm:$0xff]
      %v276 = vld [vmem:[%s268 + $0x38] sm:$0xff]
      %v277 = vld [vmem:[%s268 + $0x40] sm:$0xff]
      %v278 = vld [vmem:[%s268 + $0x48] sm:$0xff]
      %v279 = vld [vmem:[%s268 + $0x50] sm:$0xff]
      %v280 = vld [vmem:[%s268 + $0x58] sm:$0xff]
      %v281 = vld [vmem:[%s268 + $0x60] sm:$0xff]
      %v282 = vld [vmem:[%s268 + $0x68] sm:$0xff]
      %v283 = vld [vmem:[%s268 + $0x70] sm:$0xff]
      %v284 = vld [vmem:[%s268 + $0x78] sm:$0xff]
      %v285 = vld [vmem:[%s268 + $0x80] sm:$0xff]
      %v286 = vld [vmem:[%s268 + $0x88] sm:$0xff]
      %v287 = vld [vmem:[%s268 + $0x90] sm:$0xff]
      %v288 = vld [vmem:[%s268 + $0x98] sm:$0xff]
      %v289 = vld [vmem:[%s268 + $0xa0] sm:$0xff]
      %v290 = vld [vmem:[%s268 + $0xa8] sm:$0xff]
      %v291 = vld [vmem:[%s268 + $0xb0] sm:$0xff]
      %v292 = vld [vmem:[%s268 + $0xb8] sm:$0xff]
      %v293 = vld [vmem:[%s268 + $0xc0] sm:$0xff]
      %v294 = vld [vmem:[%s268 + $0xc8] sm:$0xff]
      %v295 = vld [vmem:[%s268 + $0xd0] sm:$0xff]
      %v296 = vld [vmem:[%s268 + $0xd8] sm:$0xff]
      %v297 = vld [vmem:[%s268 + $0xe0] sm:$0xff]
      %v298 = vld [vmem:[%s268 + $0xe8] sm:$0xff]
      %v299 = vld [vmem:[%s268 + $0xf0] sm:$0xff]
      %v300 = vld [vmem:[%s268 + $0xf8] sm:$0xff]
      %v301 = vld [vmem:[%s268 + $0x100] sm:$0xff]
      %v302 = vld [vmem:[%s268 + $0x108] sm:$0xff]
      %v303 = vld [vmem:[%s268 + $0x110] sm:$0xff]
      %v304 = vld [vmem:[%s268 + $0x118] sm:$0xff]
      %v305 = vld [vmem:[%s268 + $0x120] sm:$0xff]
      %v306 = vld [vmem:[%s268 + $0x128] sm:$0xff]
      %v307 = vld [vmem:[%s268 + $0x130] sm:$0xff]
      %v308 = vld [vmem:[%s268 + $0x138] sm:$0xff]
      %v309 = vld [vmem:[%s268 + $0x140] sm:$0xff]
      %v310 = vld [vmem:[%s268 + $0x148] sm:$0xff]
      %v311 = vld [vmem:[%s268 + $0x150] sm:$0xff]
      %v312 = vld [vmem:[%s268 + $0x158] sm:$0xff]
      %v313 = vld [vmem:[%s268 + $0x160] sm:$0xff]
      %v314 = vld [vmem:[%s268 + $0x168] sm:$0xff]
      %v315 = vld [vmem:[%s268 + $0x170] sm:$0xff]
      %v316 = vld [vmem:[%s268 + $0x178] sm:$0xff]
      %s317 = sadd.s32 %s167, 24
      %s318 = scalar_lea.vmem %s156, %s317
      %v319 = vld [vmem:[%s318] sm:$0xff]
      %v320 = vld [vmem:[%s318 + $0x8] sm:$0xff]
      %v321 = vld [vmem:[%s318 + $0x10] sm:$0xff]
      %v322 = vld [vmem:[%s318 + $0x18] sm:$0xff]
      %v323 = vld [vmem:[%s318 + $0x20] sm:$0xff]
      %v324 = vld [vmem:[%s318 + $0x28] sm:$0xff]
      %v325 = vld [vmem:[%s318 + $0x30] sm:$0xff]
      %v326 = vld [vmem:[%s318 + $0x38] sm:$0xff]
      %v327 = vld [vmem:[%s318 + $0x40] sm:$0xff]
      %v328 = vld [vmem:[%s318 + $0x48] sm:$0xff]
      %v329 = vld [vmem:[%s318 + $0x50] sm:$0xff]
      %v330 = vld [vmem:[%s318 + $0x58] sm:$0xff]
      %v331 = vld [vmem:[%s318 + $0x60] sm:$0xff]
      %v332 = vld [vmem:[%s318 + $0x68] sm:$0xff]
      %v333 = vld [vmem:[%s318 + $0x70] sm:$0xff]
      %v334 = vld [vmem:[%s318 + $0x78] sm:$0xff]
      %v335 = vld [vmem:[%s318 + $0x80] sm:$0xff]
      %v336 = vld [vmem:[%s318 + $0x88] sm:$0xff]
      %v337 = vld [vmem:[%s318 + $0x90] sm:$0xff]
      %v338 = vld [vmem:[%s318 + $0x98] sm:$0xff]
      %v339 = vld [vmem:[%s318 + $0xa0] sm:$0xff]
      %v340 = vld [vmem:[%s318 + $0xa8] sm:$0xff]
      %v341 = vld [vmem:[%s318 + $0xb0] sm:$0xff]
      %v342 = vld [vmem:[%s318 + $0xb8] sm:$0xff]
      %v343 = vld [vmem:[%s318 + $0xc0] sm:$0xff]
      %v344 = vld [vmem:[%s318 + $0xc8] sm:$0xff]
      %v345 = vld [vmem:[%s318 + $0xd0] sm:$0xff]
      %v346 = vld [vmem:[%s318 + $0xd8] sm:$0xff]
      %v347 = vld [vmem:[%s318 + $0xe0] sm:$0xff]
      %v348 = vld [vmem:[%s318 + $0xe8] sm:$0xff]
      %v349 = vld [vmem:[%s318 + $0xf0] sm:$0xff]
      %v350 = vld [vmem:[%s318 + $0xf8] sm:$0xff]
      %v351 = vld [vmem:[%s318 + $0x100] sm:$0xff]
      %v352 = vld [vmem:[%s318 + $0x108] sm:$0xff]
      %v353 = vld [vmem:[%s318 + $0x110] sm:$0xff]
      %v354 = vld [vmem:[%s318 + $0x118] sm:$0xff]
      %v355 = vld [vmem:[%s318 + $0x120] sm:$0xff]
      %v356 = vld [vmem:[%s318 + $0x128] sm:$0xff]
      %v357 = vld [vmem:[%s318 + $0x130] sm:$0xff]
      %v358 = vld [vmem:[%s318 + $0x138] sm:$0xff]
      %v359 = vld [vmem:[%s318 + $0x140] sm:$0xff]
      %v360 = vld [vmem:[%s318 + $0x148] sm:$0xff]
      %v361 = vld [vmem:[%s318 + $0x150] sm:$0xff]
      %v362 = vld [vmem:[%s318 + $0x158] sm:$0xff]
      %v363 = vld [vmem:[%s318 + $0x160] sm:$0xff]
      %v364 = vld [vmem:[%s318 + $0x168] sm:$0xff]
      %v365 = vld [vmem:[%s318 + $0x170] sm:$0xff]
      %v366 = vld [vmem:[%s318 + $0x178] sm:$0xff]
      %s367 = sadd.s32 %s167, 25
      %s368 = scalar_lea.vmem %s156, %s367
      %v369 = vld [vmem:[%s368] sm:$0xff]
      %v370 = vld [vmem:[%s368 + $0x8] sm:$0xff]
      %v371 = vld [vmem:[%s368 + $0x10] sm:$0xff]
      %v372 = vld [vmem:[%s368 + $0x18] sm:$0xff]
      %v373 = vld [vmem:[%s368 + $0x20] sm:$0xff]
      %v374 = vld [vmem:[%s368 + $0x28] sm:$0xff]
      %v375 = vld [vmem:[%s368 + $0x30] sm:$0xff]
      %v376 = vld [vmem:[%s368 + $0x38] sm:$0xff]
      %v377 = vld [vmem:[%s368 + $0x40] sm:$0xff]
      %v378 = vld [vmem:[%s368 + $0x48] sm:$0xff]
      %v379 = vld [vmem:[%s368 + $0x50] sm:$0xff]
      %v380 = vld [vmem:[%s368 + $0x58] sm:$0xff]
      %v381 = vld [vmem:[%s368 + $0x60] sm:$0xff]
      %v382 = vld [vmem:[%s368 + $0x68] sm:$0xff]
      %v383 = vld [vmem:[%s368 + $0x70] sm:$0xff]
      %v384 = vld [vmem:[%s368 + $0x78] sm:$0xff]
      %v385 = vld [vmem:[%s368 + $0x80] sm:$0xff]
      %v386 = vld [vmem:[%s368 + $0x88] sm:$0xff]
      %v387 = vld [vmem:[%s368 + $0x90] sm:$0xff]
      %v388 = vld [vmem:[%s368 + $0x98] sm:$0xff]
      %v389 = vld [vmem:[%s368 + $0xa0] sm:$0xff]
      %v390 = vld [vmem:[%s368 + $0xa8] sm:$0xff]
      %v391 = vld [vmem:[%s368 + $0xb0] sm:$0xff]
      %v392 = vld [vmem:[%s368 + $0xb8] sm:$0xff]
      %v393 = vld [vmem:[%s368 + $0xc0] sm:$0xff]
      %v394 = vld [vmem:[%s368 + $0xc8] sm:$0xff]
      %v395 = vld [vmem:[%s368 + $0xd0] sm:$0xff]
      %v396 = vld [vmem:[%s368 + $0xd8] sm:$0xff]
      %v397 = vld [vmem:[%s368 + $0xe0] sm:$0xff]
      %v398 = vld [vmem:[%s368 + $0xe8] sm:$0xff]
      %v399 = vld [vmem:[%s368 + $0xf0] sm:$0xff]
      %v400 = vld [vmem:[%s368 + $0xf8] sm:$0xff]
      %v401 = vld [vmem:[%s368 + $0x100] sm:$0xff]
      %v402 = vld [vmem:[%s368 + $0x108] sm:$0xff]
      %v403 = vld [vmem:[%s368 + $0x110] sm:$0xff]
      %v404 = vld [vmem:[%s368 + $0x118] sm:$0xff]
      %v405 = vld [vmem:[%s368 + $0x120] sm:$0xff]
      %v406 = vld [vmem:[%s368 + $0x128] sm:$0xff]
      %v407 = vld [vmem:[%s368 + $0x130] sm:$0xff]
      %v408 = vld [vmem:[%s368 + $0x138] sm:$0xff]
      %v409 = vld [vmem:[%s368 + $0x140] sm:$0xff]
      %v410 = vld [vmem:[%s368 + $0x148] sm:$0xff]
      %v411 = vld [vmem:[%s368 + $0x150] sm:$0xff]
      %v412 = vld [vmem:[%s368 + $0x158] sm:$0xff]
      %v413 = vld [vmem:[%s368 + $0x160] sm:$0xff]
      %v414 = vld [vmem:[%s368 + $0x168] sm:$0xff]
      %v415 = vld [vmem:[%s368 + $0x170] sm:$0xff]
      %v416 = vld [vmem:[%s368 + $0x178] sm:$0xff]
      %s417 = sadd.s32 %s167, 26
      %s418 = scalar_lea.vmem %s156, %s417
      %v419 = vld [vmem:[%s418] sm:$0xff]
      %v420 = vld [vmem:[%s418 + $0x8] sm:$0xff]
      %v421 = vld [vmem:[%s418 + $0x10] sm:$0xff]
      %v422 = vld [vmem:[%s418 + $0x18] sm:$0xff]
      %v423 = vld [vmem:[%s418 + $0x20] sm:$0xff]
      %v424 = vld [vmem:[%s418 + $0x28] sm:$0xff]
      %v425 = vld [vmem:[%s418 + $0x30] sm:$0xff]
      %v426 = vld [vmem:[%s418 + $0x38] sm:$0xff]
      %v427 = vld [vmem:[%s418 + $0x40] sm:$0xff]
      %v428 = vld [vmem:[%s418 + $0x48] sm:$0xff]
      %v429 = vld [vmem:[%s418 + $0x50] sm:$0xff]
      %v430 = vld [vmem:[%s418 + $0x58] sm:$0xff]
      %v431 = vld [vmem:[%s418 + $0x60] sm:$0xff]
      %v432 = vld [vmem:[%s418 + $0x68] sm:$0xff]
      %v433 = vld [vmem:[%s418 + $0x70] sm:$0xff]
      %v434 = vld [vmem:[%s418 + $0x78] sm:$0xff]
      %v435 = vld [vmem:[%s418 + $0x80] sm:$0xff]
      %v436 = vld [vmem:[%s418 + $0x88] sm:$0xff]
      %v437 = vld [vmem:[%s418 + $0x90] sm:$0xff]
      %v438 = vld [vmem:[%s418 + $0x98] sm:$0xff]
      %v439 = vld [vmem:[%s418 + $0xa0] sm:$0xff]
      %v440 = vld [vmem:[%s418 + $0xa8] sm:$0xff]
      %v441 = vld [vmem:[%s418 + $0xb0] sm:$0xff]
      %v442 = vld [vmem:[%s418 + $0xb8] sm:$0xff]
      %v443 = vld [vmem:[%s418 + $0xc0] sm:$0xff]
      %v444 = vld [vmem:[%s418 + $0xc8] sm:$0xff]
      %v445 = vld [vmem:[%s418 + $0xd0] sm:$0xff]
      %v446 = vld [vmem:[%s418 + $0xd8] sm:$0xff]
      %v447 = vld [vmem:[%s418 + $0xe0] sm:$0xff]
      %v448 = vld [vmem:[%s418 + $0xe8] sm:$0xff]
      %v449 = vld [vmem:[%s418 + $0xf0] sm:$0xff]
      %v450 = vld [vmem:[%s418 + $0xf8] sm:$0xff]
      %v451 = vld [vmem:[%s418 + $0x100] sm:$0xff]
      %v452 = vld [vmem:[%s418 + $0x108] sm:$0xff]
      %v453 = vld [vmem:[%s418 + $0x110] sm:$0xff]
      %v454 = vld [vmem:[%s418 + $0x118] sm:$0xff]
      %v455 = vld [vmem:[%s418 + $0x120] sm:$0xff]
      %v456 = vld [vmem:[%s418 + $0x128] sm:$0xff]
      %v457 = vld [vmem:[%s418 + $0x130] sm:$0xff]
      %v458 = vld [vmem:[%s418 + $0x138] sm:$0xff]
      %v459 = vld [vmem:[%s418 + $0x140] sm:$0xff]
      %v460 = vld [vmem:[%s418 + $0x148] sm:$0xff]
      %v461 = vld [vmem:[%s418 + $0x150] sm:$0xff]
      %v462 = vld [vmem:[%s418 + $0x158] sm:$0xff]
      %v463 = vld [vmem:[%s418 + $0x160] sm:$0xff]
      %v464 = vld [vmem:[%s418 + $0x168] sm:$0xff]
      %v465 = vld [vmem:[%s418 + $0x170] sm:$0xff]
      %v466 = vld [vmem:[%s418 + $0x178] sm:$0xff]
      %s467 = sadd.s32 %s167, 48
      %s468 = scalar_lea.vmem %s156, %s467
      %v469 = vld [vmem:[%s468] sm:$0xff]
      %v470 = vld [vmem:[%s468 + $0x8] sm:$0xff]
      %v471 = vld [vmem:[%s468 + $0x10] sm:$0xff]
      %v472 = vld [vmem:[%s468 + $0x18] sm:$0xff]
      %v473 = vld [vmem:[%s468 + $0x20] sm:$0xff]
      %v474 = vld [vmem:[%s468 + $0x28] sm:$0xff]
      %v475 = vld [vmem:[%s468 + $0x30] sm:$0xff]
      %v476 = vld [vmem:[%s468 + $0x38] sm:$0xff]
      %v477 = vld [vmem:[%s468 + $0x40] sm:$0xff]
      %v478 = vld [vmem:[%s468 + $0x48] sm:$0xff]
      %v479 = vld [vmem:[%s468 + $0x50] sm:$0xff]
      %v480 = vld [vmem:[%s468 + $0x58] sm:$0xff]
      %v481 = vld [vmem:[%s468 + $0x60] sm:$0xff]
      %v482 = vld [vmem:[%s468 + $0x68] sm:$0xff]
      %v483 = vld [vmem:[%s468 + $0x70] sm:$0xff]
      %v484 = vld [vmem:[%s468 + $0x78] sm:$0xff]
      %v485 = vld [vmem:[%s468 + $0x80] sm:$0xff]
      %v486 = vld [vmem:[%s468 + $0x88] sm:$0xff]
      %v487 = vld [vmem:[%s468 + $0x90] sm:$0xff]
      %v488 = vld [vmem:[%s468 + $0x98] sm:$0xff]
      %v489 = vld [vmem:[%s468 + $0xa0] sm:$0xff]
      %v490 = vld [vmem:[%s468 + $0xa8] sm:$0xff]
      %v491 = vld [vmem:[%s468 + $0xb0] sm:$0xff]
      %v492 = vld [vmem:[%s468 + $0xb8] sm:$0xff]
      %v493 = vld [vmem:[%s468 + $0xc0] sm:$0xff]
      %v494 = vld [vmem:[%s468 + $0xc8] sm:$0xff]
      %v495 = vld [vmem:[%s468 + $0xd0] sm:$0xff]
      %v496 = vld [vmem:[%s468 + $0xd8] sm:$0xff]
      %v497 = vld [vmem:[%s468 + $0xe0] sm:$0xff]
      %v498 = vld [vmem:[%s468 + $0xe8] sm:$0xff]
      %v499 = vld [vmem:[%s468 + $0xf0] sm:$0xff]
      %v500 = vld [vmem:[%s468 + $0xf8] sm:$0xff]
      %v501 = vld [vmem:[%s468 + $0x100] sm:$0xff]
      %v502 = vld [vmem:[%s468 + $0x108] sm:$0xff]
      %v503 = vld [vmem:[%s468 + $0x110] sm:$0xff]
      %v504 = vld [vmem:[%s468 + $0x118] sm:$0xff]
      %v505 = vld [vmem:[%s468 + $0x120] sm:$0xff]
      %v506 = vld [vmem:[%s468 + $0x128] sm:$0xff]
      %v507 = vld [vmem:[%s468 + $0x130] sm:$0xff]
      %v508 = vld [vmem:[%s468 + $0x138] sm:$0xff]
      %v509 = vld [vmem:[%s468 + $0x140] sm:$0xff]
      %v510 = vld [vmem:[%s468 + $0x148] sm:$0xff]
      %v511 = vld [vmem:[%s468 + $0x150] sm:$0xff]
      %v512 = vld [vmem:[%s468 + $0x158] sm:$0xff]
      %v513 = vld [vmem:[%s468 + $0x160] sm:$0xff]
      %v514 = vld [vmem:[%s468 + $0x168] sm:$0xff]
      %v515 = vld [vmem:[%s468 + $0x170] sm:$0xff]
      %v516 = vld [vmem:[%s468 + $0x178] sm:$0xff]
      %s517 = sadd.s32 %s167, 49
      %s518 = scalar_lea.vmem %s156, %s517
      %v519 = vld [vmem:[%s518] sm:$0xff]
      %v520 = vld [vmem:[%s518 + $0x8] sm:$0xff]
      %v521 = vld [vmem:[%s518 + $0x10] sm:$0xff]
      %v522 = vld [vmem:[%s518 + $0x18] sm:$0xff]
      %v523 = vld [vmem:[%s518 + $0x20] sm:$0xff]
      %v524 = vld [vmem:[%s518 + $0x28] sm:$0xff]
      %v525 = vld [vmem:[%s518 + $0x30] sm:$0xff]
      %v526 = vld [vmem:[%s518 + $0x38] sm:$0xff]
      %v527 = vld [vmem:[%s518 + $0x40] sm:$0xff]
      %v528 = vld [vmem:[%s518 + $0x48] sm:$0xff]
      %v529 = vld [vmem:[%s518 + $0x50] sm:$0xff]
      %v530 = vld [vmem:[%s518 + $0x58] sm:$0xff]
      %v531 = vld [vmem:[%s518 + $0x60] sm:$0xff]
      %v532 = vld [vmem:[%s518 + $0x68] sm:$0xff]
      %v533 = vld [vmem:[%s518 + $0x70] sm:$0xff]
      %v534 = vld [vmem:[%s518 + $0x78] sm:$0xff]
      %v535 = vld [vmem:[%s518 + $0x80] sm:$0xff]
      %v536 = vld [vmem:[%s518 + $0x88] sm:$0xff]
      %v537 = vld [vmem:[%s518 + $0x90] sm:$0xff]
      %v538 = vld [vmem:[%s518 + $0x98] sm:$0xff]
      %v539 = vld [vmem:[%s518 + $0xa0] sm:$0xff]
      %v540 = vld [vmem:[%s518 + $0xa8] sm:$0xff]
      %v541 = vld [vmem:[%s518 + $0xb0] sm:$0xff]
      %v542 = vld [vmem:[%s518 + $0xb8] sm:$0xff]
      %v543 = vld [vmem:[%s518 + $0xc0] sm:$0xff]
      %v544 = vld [vmem:[%s518 + $0xc8] sm:$0xff]
      %v545 = vld [vmem:[%s518 + $0xd0] sm:$0xff]
      %v546 = vld [vmem:[%s518 + $0xd8] sm:$0xff]
      %v547 = vld [vmem:[%s518 + $0xe0] sm:$0xff]
      %v548 = vld [vmem:[%s518 + $0xe8] sm:$0xff]
      %v549 = vld [vmem:[%s518 + $0xf0] sm:$0xff]
      %v550 = vld [vmem:[%s518 + $0xf8] sm:$0xff]
      %v551 = vld [vmem:[%s518 + $0x100] sm:$0xff]
      %v552 = vld [vmem:[%s518 + $0x108] sm:$0xff]
      %v553 = vld [vmem:[%s518 + $0x110] sm:$0xff]
      %v554 = vld [vmem:[%s518 + $0x118] sm:$0xff]
      %v555 = vld [vmem:[%s518 + $0x120] sm:$0xff]
      %v556 = vld [vmem:[%s518 + $0x128] sm:$0xff]
      %v557 = vld [vmem:[%s518 + $0x130] sm:$0xff]
      %v558 = vld [vmem:[%s518 + $0x138] sm:$0xff]
      %v559 = vld [vmem:[%s518 + $0x140] sm:$0xff]
      %v560 = vld [vmem:[%s518 + $0x148] sm:$0xff]
      %v561 = vld [vmem:[%s518 + $0x150] sm:$0xff]
      %v562 = vld [vmem:[%s518 + $0x158] sm:$0xff]
      %v563 = vld [vmem:[%s518 + $0x160] sm:$0xff]
      %v564 = vld [vmem:[%s518 + $0x168] sm:$0xff]
      %v565 = vld [vmem:[%s518 + $0x170] sm:$0xff]
      %v566 = vld [vmem:[%s518 + $0x178] sm:$0xff]
      %s567 = sadd.s32 %s167, 50
      %s568 = scalar_lea.vmem %s156, %s567
      %v569 = vld [vmem:[%s568] sm:$0xff]
      %v570 = vld [vmem:[%s568 + $0x8] sm:$0xff]
      %v571 = vld [vmem:[%s568 + $0x10] sm:$0xff]
      %v572 = vld [vmem:[%s568 + $0x18] sm:$0xff]
      %v573 = vld [vmem:[%s568 + $0x20] sm:$0xff]
      %v574 = vld [vmem:[%s568 + $0x28] sm:$0xff]
      %v575 = vld [vmem:[%s568 + $0x30] sm:$0xff]
      %v576 = vld [vmem:[%s568 + $0x38] sm:$0xff]
      %v577 = vld [vmem:[%s568 + $0x40] sm:$0xff]
      %v578 = vld [vmem:[%s568 + $0x48] sm:$0xff]
      %v579 = vld [vmem:[%s568 + $0x50] sm:$0xff]
      %v580 = vld [vmem:[%s568 + $0x58] sm:$0xff]
      %v581 = vld [vmem:[%s568 + $0x60] sm:$0xff]
      %v582 = vld [vmem:[%s568 + $0x68] sm:$0xff]
      %v583 = vld [vmem:[%s568 + $0x70] sm:$0xff]
      %v584 = vld [vmem:[%s568 + $0x78] sm:$0xff]
      %v585 = vld [vmem:[%s568 + $0x80] sm:$0xff]
      %v586 = vld [vmem:[%s568 + $0x88] sm:$0xff]
      %v587 = vld [vmem:[%s568 + $0x90] sm:$0xff]
      %v588 = vld [vmem:[%s568 + $0x98] sm:$0xff]
      %v589 = vld [vmem:[%s568 + $0xa0] sm:$0xff]
      %v590 = vld [vmem:[%s568 + $0xa8] sm:$0xff]
      %v591 = vld [vmem:[%s568 + $0xb0] sm:$0xff]
      %v592 = vld [vmem:[%s568 + $0xb8] sm:$0xff]
      %v593 = vld [vmem:[%s568 + $0xc0] sm:$0xff]
      %v594 = vld [vmem:[%s568 + $0xc8] sm:$0xff]
      %v595 = vld [vmem:[%s568 + $0xd0] sm:$0xff]
      %v596 = vld [vmem:[%s568 + $0xd8] sm:$0xff]
      %v597 = vld [vmem:[%s568 + $0xe0] sm:$0xff]
      %v598 = vld [vmem:[%s568 + $0xe8] sm:$0xff]
      %v599 = vld [vmem:[%s568 + $0xf0] sm:$0xff]
      %v600 = vld [vmem:[%s568 + $0xf8] sm:$0xff]
      %v601 = vld [vmem:[%s568 + $0x100] sm:$0xff]
      %v602 = vld [vmem:[%s568 + $0x108] sm:$0xff]
      %v603 = vld [vmem:[%s568 + $0x110] sm:$0xff]
      %v604 = vld [vmem:[%s568 + $0x118] sm:$0xff]
      %v605 = vld [vmem:[%s568 + $0x120] sm:$0xff]
      %v606 = vld [vmem:[%s568 + $0x128] sm:$0xff]
      %v607 = vld [vmem:[%s568 + $0x130] sm:$0xff]
      %v608 = vld [vmem:[%s568 + $0x138] sm:$0xff]
      %v609 = vld [vmem:[%s568 + $0x140] sm:$0xff]
      %v610 = vld [vmem:[%s568 + $0x148] sm:$0xff]
      %v611 = vld [vmem:[%s568 + $0x150] sm:$0xff]
      %v612 = vld [vmem:[%s568 + $0x158] sm:$0xff]
      %v613 = vld [vmem:[%s568 + $0x160] sm:$0xff]
      %v614 = vld [vmem:[%s568 + $0x168] sm:$0xff]
      %v615 = vld [vmem:[%s568 + $0x170] sm:$0xff]
      %v616 = vld [vmem:[%s568 + $0x178] sm:$0xff]
      %665 = vrot.lane.b32.xlu0 %v219, 4
      %v666 = vpop.permute.xlu0 %665
      %667 = vrot.lane.b32.xlu0 %v220, 4
      %v668 = vpop.permute.xlu0 %667
      %669 = vrot.lane.b32.xlu0 %v221, 4
      %v670 = vpop.permute.xlu0 %669
      %671 = vrot.lane.b32.xlu0 %v222, 4
      %v672 = vpop.permute.xlu0 %671
      %673 = vrot.lane.b32.xlu0 %v223, 4
      %v674 = vpop.permute.xlu0 %673
      %675 = vrot.lane.b32.xlu0 %v224, 4
      %v676 = vpop.permute.xlu0 %675
      %677 = vrot.lane.b32.xlu0 %v225, 4
      %v678 = vpop.permute.xlu0 %677
      %679 = vrot.lane.b32.xlu0 %v226, 4
      %v680 = vpop.permute.xlu0 %679
      %681 = vrot.lane.b32.xlu0 %v227, 4
      %v682 = vpop.permute.xlu0 %681
      %683 = vrot.lane.b32.xlu0 %v228, 4
      %v684 = vpop.permute.xlu0 %683
      %685 = vrot.lane.b32.xlu0 %v229, 4
      %v686 = vpop.permute.xlu0 %685
      %687 = vrot.lane.b32.xlu0 %v230, 4
      %v688 = vpop.permute.xlu0 %687
      %689 = vrot.lane.b32.xlu0 %v231, 4
      %v690 = vpop.permute.xlu0 %689
      %691 = vrot.lane.b32.xlu0 %v232, 4
      %v692 = vpop.permute.xlu0 %691
      %693 = vrot.lane.b32.xlu0 %v233, 4
      %v694 = vpop.permute.xlu0 %693
      %695 = vrot.lane.b32.xlu0 %v234, 4
      %v696 = vpop.permute.xlu0 %695
      %697 = vrot.lane.b32.xlu0 %v235, 4
      %v698 = vpop.permute.xlu0 %697
      %699 = vrot.lane.b32.xlu0 %v236, 4
      %v700 = vpop.permute.xlu0 %699
      %701 = vrot.lane.b32.xlu0 %v237, 4
      %v702 = vpop.permute.xlu0 %701
      %703 = vrot.lane.b32.xlu0 %v238, 4
      %v704 = vpop.permute.xlu0 %703
      %705 = vrot.lane.b32.xlu0 %v239, 4
      %v706 = vpop.permute.xlu0 %705
      %707 = vrot.lane.b32.xlu0 %v240, 4
      %v708 = vpop.permute.xlu0 %707
      %709 = vrot.lane.b32.xlu0 %v241, 4
      %v710 = vpop.permute.xlu0 %709
      %711 = vrot.lane.b32.xlu0 %v242, 4
      %v712 = vpop.permute.xlu0 %711
      %713 = vrot.lane.b32.xlu0 %v243, 4
      %v714 = vpop.permute.xlu0 %713
      %715 = vrot.lane.b32.xlu0 %v244, 4
      %v716 = vpop.permute.xlu0 %715
      %717 = vrot.lane.b32.xlu0 %v245, 4
      %v718 = vpop.permute.xlu0 %717
      %719 = vrot.lane.b32.xlu0 %v246, 4
      %v720 = vpop.permute.xlu0 %719
      %721 = vrot.lane.b32.xlu0 %v247, 4
      %v722 = vpop.permute.xlu0 %721
      %723 = vrot.lane.b32.xlu0 %v248, 4
      %v724 = vpop.permute.xlu0 %723
      %725 = vrot.lane.b32.xlu0 %v249, 4
      %v726 = vpop.permute.xlu0 %725
      %727 = vrot.lane.b32.xlu0 %v250, 4
      %v728 = vpop.permute.xlu0 %727
      %729 = vrot.lane.b32.xlu0 %v251, 4
      %v730 = vpop.permute.xlu0 %729
      %731 = vrot.lane.b32.xlu0 %v252, 4
      %v732 = vpop.permute.xlu0 %731
      %733 = vrot.lane.b32.xlu0 %v253, 4
      %v734 = vpop.permute.xlu0 %733
      %735 = vrot.lane.b32.xlu0 %v254, 4
      %v736 = vpop.permute.xlu0 %735
      %737 = vrot.lane.b32.xlu0 %v255, 4
      %v738 = vpop.permute.xlu0 %737
      %739 = vrot.lane.b32.xlu0 %v256, 4
      %v740 = vpop.permute.xlu0 %739
      %741 = vrot.lane.b32.xlu0 %v257, 4
      %v742 = vpop.permute.xlu0 %741
      %743 = vrot.lane.b32.xlu0 %v258, 4
      %v744 = vpop.permute.xlu0 %743
      %745 = vrot.lane.b32.xlu0 %v259, 4
      %v746 = vpop.permute.xlu0 %745
      %747 = vrot.lane.b32.xlu0 %v260, 4
      %v748 = vpop.permute.xlu0 %747
      %749 = vrot.lane.b32.xlu0 %v261, 4
      %v750 = vpop.permute.xlu0 %749
      %751 = vrot.lane.b32.xlu0 %v262, 4
      %v752 = vpop.permute.xlu0 %751
      %753 = vrot.lane.b32.xlu0 %v263, 4
      %v754 = vpop.permute.xlu0 %753
      %755 = vrot.lane.b32.xlu0 %v264, 4
      %v756 = vpop.permute.xlu0 %755
      %757 = vrot.lane.b32.xlu0 %v265, 4
      %v758 = vpop.permute.xlu0 %757
      %759 = vrot.lane.b32.xlu0 %v266, 4
      %v760 = vpop.permute.xlu0 %759
      %857 = vrot.lane.b32.xlu0 %v269, 8
      %v858 = vpop.permute.xlu0 %857
      %859 = vrot.lane.b32.xlu0 %v270, 8
      %v860 = vpop.permute.xlu0 %859
      %861 = vrot.lane.b32.xlu0 %v271, 8
      %v862 = vpop.permute.xlu0 %861
      %863 = vrot.lane.b32.xlu0 %v272, 8
      %v864 = vpop.permute.xlu0 %863
      %865 = vrot.lane.b32.xlu0 %v273, 8
      %v866 = vpop.permute.xlu0 %865
      %867 = vrot.lane.b32.xlu0 %v274, 8
      %v868 = vpop.permute.xlu0 %867
      %869 = vrot.lane.b32.xlu0 %v275, 8
      %v870 = vpop.permute.xlu0 %869
      %871 = vrot.lane.b32.xlu0 %v276, 8
      %v872 = vpop.permute.xlu0 %871
      %873 = vrot.lane.b32.xlu0 %v277, 8
      %v874 = vpop.permute.xlu0 %873
      %875 = vrot.lane.b32.xlu0 %v278, 8
      %v876 = vpop.permute.xlu0 %875
      %877 = vrot.lane.b32.xlu0 %v279, 8
      %v878 = vpop.permute.xlu0 %877
      %879 = vrot.lane.b32.xlu0 %v280, 8
      %v880 = vpop.permute.xlu0 %879
      %881 = vrot.lane.b32.xlu0 %v281, 8
      %v882 = vpop.permute.xlu0 %881
      %883 = vrot.lane.b32.xlu0 %v282, 8
      %v884 = vpop.permute.xlu0 %883
      %885 = vrot.lane.b32.xlu0 %v283, 8
      %v886 = vpop.permute.xlu0 %885
      %887 = vrot.lane.b32.xlu0 %v284, 8
      %v888 = vpop.permute.xlu0 %887
      %889 = vrot.lane.b32.xlu0 %v285, 8
      %v890 = vpop.permute.xlu0 %889
      %891 = vrot.lane.b32.xlu0 %v286, 8
      %v892 = vpop.permute.xlu0 %891
      %893 = vrot.lane.b32.xlu0 %v287, 8
      %v894 = vpop.permute.xlu0 %893
      %895 = vrot.lane.b32.xlu0 %v288, 8
      %v896 = vpop.permute.xlu0 %895
      %897 = vrot.lane.b32.xlu0 %v289, 8
      %v898 = vpop.permute.xlu0 %897
      %899 = vrot.lane.b32.xlu0 %v290, 8
      %v900 = vpop.permute.xlu0 %899
      %901 = vrot.lane.b32.xlu0 %v291, 8
      %v902 = vpop.permute.xlu0 %901
      %903 = vrot.lane.b32.xlu0 %v292, 8
      %v904 = vpop.permute.xlu0 %903
      %905 = vrot.lane.b32.xlu0 %v293, 8
      %v906 = vpop.permute.xlu0 %905
      %907 = vrot.lane.b32.xlu0 %v294, 8
      %v908 = vpop.permute.xlu0 %907
      %909 = vrot.lane.b32.xlu0 %v295, 8
      %v910 = vpop.permute.xlu0 %909
      %911 = vrot.lane.b32.xlu0 %v296, 8
      %v912 = vpop.permute.xlu0 %911
      %913 = vrot.lane.b32.xlu0 %v297, 8
      %v914 = vpop.permute.xlu0 %913
      %915 = vrot.lane.b32.xlu0 %v298, 8
      %v916 = vpop.permute.xlu0 %915
      %917 = vrot.lane.b32.xlu0 %v299, 8
      %v918 = vpop.permute.xlu0 %917
      %919 = vrot.lane.b32.xlu0 %v300, 8
      %v920 = vpop.permute.xlu0 %919
      %921 = vrot.lane.b32.xlu0 %v301, 8
      %v922 = vpop.permute.xlu0 %921
      %923 = vrot.lane.b32.xlu0 %v302, 8
      %v924 = vpop.permute.xlu0 %923
      %925 = vrot.lane.b32.xlu0 %v303, 8
      %v926 = vpop.permute.xlu0 %925
      %927 = vrot.lane.b32.xlu0 %v304, 8
      %v928 = vpop.permute.xlu0 %927
      %929 = vrot.lane.b32.xlu0 %v305, 8
      %v930 = vpop.permute.xlu0 %929
      %931 = vrot.lane.b32.xlu0 %v306, 8
      %v932 = vpop.permute.xlu0 %931
      %933 = vrot.lane.b32.xlu0 %v307, 8
      %v934 = vpop.permute.xlu0 %933
      %935 = vrot.lane.b32.xlu0 %v308, 8
      %v936 = vpop.permute.xlu0 %935
      %937 = vrot.lane.b32.xlu0 %v309, 8
      %v938 = vpop.permute.xlu0 %937
      %939 = vrot.lane.b32.xlu0 %v310, 8
      %v940 = vpop.permute.xlu0 %939
      %941 = vrot.lane.b32.xlu0 %v311, 8
      %v942 = vpop.permute.xlu0 %941
      %943 = vrot.lane.b32.xlu0 %v312, 8
      %v944 = vpop.permute.xlu0 %943
      %945 = vrot.lane.b32.xlu0 %v313, 8
      %v946 = vpop.permute.xlu0 %945
      %947 = vrot.lane.b32.xlu0 %v314, 8
      %v948 = vpop.permute.xlu0 %947
      %949 = vrot.lane.b32.xlu0 %v315, 8
      %v950 = vpop.permute.xlu0 %949
      %951 = vrot.lane.b32.xlu0 %v316, 8
      %v952 = vpop.permute.xlu0 %951
      %1049 = vrot.lane.b32.xlu0 %v319, 12
      %v1050 = vpop.permute.xlu0 %1049
      %1051 = vrot.lane.b32.xlu0 %v320, 12
      %v1052 = vpop.permute.xlu0 %1051
      %1053 = vrot.lane.b32.xlu0 %v321, 12
      %v1054 = vpop.permute.xlu0 %1053
      %1055 = vrot.lane.b32.xlu0 %v322, 12
      %v1056 = vpop.permute.xlu0 %1055
      %1057 = vrot.lane.b32.xlu0 %v323, 12
      %v1058 = vpop.permute.xlu0 %1057
      %1059 = vrot.lane.b32.xlu0 %v324, 12
      %v1060 = vpop.permute.xlu0 %1059
      %1061 = vrot.lane.b32.xlu0 %v325, 12
      %v1062 = vpop.permute.xlu0 %1061
      %1063 = vrot.lane.b32.xlu0 %v326, 12
      %v1064 = vpop.permute.xlu0 %1063
      %1065 = vrot.lane.b32.xlu0 %v327, 12
      %v1066 = vpop.permute.xlu0 %1065
      %1067 = vrot.lane.b32.xlu0 %v328, 12
      %v1068 = vpop.permute.xlu0 %1067
      %1069 = vrot.lane.b32.xlu0 %v329, 12
      %v1070 = vpop.permute.xlu0 %1069
      %1071 = vrot.lane.b32.xlu0 %v330, 12
      %v1072 = vpop.permute.xlu0 %1071
      %1073 = vrot.lane.b32.xlu0 %v331, 12
      %v1074 = vpop.permute.xlu0 %1073
      %1075 = vrot.lane.b32.xlu0 %v332, 12
      %v1076 = vpop.permute.xlu0 %1075
      %1077 = vrot.lane.b32.xlu0 %v333, 12
      %v1078 = vpop.permute.xlu0 %1077
      %1079 = vrot.lane.b32.xlu0 %v334, 12
      %v1080 = vpop.permute.xlu0 %1079
      %1081 = vrot.lane.b32.xlu0 %v335, 12
      %v1082 = vpop.permute.xlu0 %1081
      %1083 = vrot.lane.b32.xlu0 %v336, 12
      %v1084 = vpop.permute.xlu0 %1083
      %1085 = vrot.lane.b32.xlu0 %v337, 12
      %v1086 = vpop.permute.xlu0 %1085
      %1087 = vrot.lane.b32.xlu0 %v338, 12
      %v1088 = vpop.permute.xlu0 %1087
      %1089 = vrot.lane.b32.xlu0 %v339, 12
      %v1090 = vpop.permute.xlu0 %1089
      %1091 = vrot.lane.b32.xlu0 %v340, 12
      %v1092 = vpop.permute.xlu0 %1091
      %1093 = vrot.lane.b32.xlu0 %v341, 12
      %v1094 = vpop.permute.xlu0 %1093
      %1095 = vrot.lane.b32.xlu0 %v342, 12
      %v1096 = vpop.permute.xlu0 %1095
      %1097 = vrot.lane.b32.xlu0 %v343, 12
      %v1098 = vpop.permute.xlu0 %1097
      %1099 = vrot.lane.b32.xlu0 %v344, 12
      %v1100 = vpop.permute.xlu0 %1099
      %1101 = vrot.lane.b32.xlu0 %v345, 12
      %v1102 = vpop.permute.xlu0 %1101
      %1103 = vrot.lane.b32.xlu0 %v346, 12
      %v1104 = vpop.permute.xlu0 %1103
      %1105 = vrot.lane.b32.xlu0 %v347, 12
      %v1106 = vpop.permute.xlu0 %1105
      %1107 = vrot.lane.b32.xlu0 %v348, 12
      %v1108 = vpop.permute.xlu0 %1107
      %1109 = vrot.lane.b32.xlu0 %v349, 12
      %v1110 = vpop.permute.xlu0 %1109
      %1111 = vrot.lane.b32.xlu0 %v350, 12
      %v1112 = vpop.permute.xlu0 %1111
      %1113 = vrot.lane.b32.xlu0 %v351, 12
      %v1114 = vpop.permute.xlu0 %1113
      %1115 = vrot.lane.b32.xlu0 %v352, 12
      %v1116 = vpop.permute.xlu0 %1115
      %1117 = vrot.lane.b32.xlu0 %v353, 12
      %v1118 = vpop.permute.xlu0 %1117
      %1119 = vrot.lane.b32.xlu0 %v354, 12
      %v1120 = vpop.permute.xlu0 %1119
      %1121 = vrot.lane.b32.xlu0 %v355, 12
      %v1122 = vpop.permute.xlu0 %1121
      %1123 = vrot.lane.b32.xlu0 %v356, 12
      %v1124 = vpop.permute.xlu0 %1123
      %1125 = vrot.lane.b32.xlu0 %v357, 12
      %v1126 = vpop.permute.xlu0 %1125
      %1127 = vrot.lane.b32.xlu0 %v358, 12
      %v1128 = vpop.permute.xlu0 %1127
      %1129 = vrot.lane.b32.xlu0 %v359, 12
      %v1130 = vpop.permute.xlu0 %1129
      %1131 = vrot.lane.b32.xlu0 %v360, 12
      %v1132 = vpop.permute.xlu0 %1131
      %1133 = vrot.lane.b32.xlu0 %v361, 12
      %v1134 = vpop.permute.xlu0 %1133
      %1135 = vrot.lane.b32.xlu0 %v362, 12
      %v1136 = vpop.permute.xlu0 %1135
      %1137 = vrot.lane.b32.xlu0 %v363, 12
      %v1138 = vpop.permute.xlu0 %1137
      %1139 = vrot.lane.b32.xlu0 %v364, 12
      %v1140 = vpop.permute.xlu0 %1139
      %1141 = vrot.lane.b32.xlu0 %v365, 12
      %v1142 = vpop.permute.xlu0 %1141
      %1143 = vrot.lane.b32.xlu0 %v366, 12
      %v1144 = vpop.permute.xlu0 %1143
      %1241 = vrot.lane.b32.xlu0 %v369, 16
      %v1242 = vpop.permute.xlu0 %1241
      %1243 = vrot.lane.b32.xlu0 %v370, 16
      %v1244 = vpop.permute.xlu0 %1243
      %1245 = vrot.lane.b32.xlu0 %v371, 16
      %v1246 = vpop.permute.xlu0 %1245
      %1247 = vrot.lane.b32.xlu0 %v372, 16
      %v1248 = vpop.permute.xlu0 %1247
      %1249 = vrot.lane.b32.xlu0 %v373, 16
      %v1250 = vpop.permute.xlu0 %1249
      %1251 = vrot.lane.b32.xlu0 %v374, 16
      %v1252 = vpop.permute.xlu0 %1251
      %1253 = vrot.lane.b32.xlu0 %v375, 16
      %v1254 = vpop.permute.xlu0 %1253
      %1255 = vrot.lane.b32.xlu0 %v376, 16
      %v1256 = vpop.permute.xlu0 %1255
      %1257 = vrot.lane.b32.xlu0 %v377, 16
      %v1258 = vpop.permute.xlu0 %1257
      %1259 = vrot.lane.b32.xlu0 %v378, 16
      %v1260 = vpop.permute.xlu0 %1259
      %1261 = vrot.lane.b32.xlu0 %v379, 16
      %v1262 = vpop.permute.xlu0 %1261
      %1263 = vrot.lane.b32.xlu0 %v380, 16
      %v1264 = vpop.permute.xlu0 %1263
      %1265 = vrot.lane.b32.xlu0 %v381, 16
      %v1266 = vpop.permute.xlu0 %1265
      %1267 = vrot.lane.b32.xlu0 %v382, 16
      %v1268 = vpop.permute.xlu0 %1267
      %1269 = vrot.lane.b32.xlu0 %v383, 16
      %v1270 = vpop.permute.xlu0 %1269
      %1271 = vrot.lane.b32.xlu0 %v384, 16
      %v1272 = vpop.permute.xlu0 %1271
      %1273 = vrot.lane.b32.xlu0 %v385, 16
      %v1274 = vpop.permute.xlu0 %1273
      %1275 = vrot.lane.b32.xlu0 %v386, 16
      %v1276 = vpop.permute.xlu0 %1275
      %1277 = vrot.lane.b32.xlu0 %v387, 16
      %v1278 = vpop.permute.xlu0 %1277
      %1279 = vrot.lane.b32.xlu0 %v388, 16
      %v1280 = vpop.permute.xlu0 %1279
      %1281 = vrot.lane.b32.xlu0 %v389, 16
      %v1282 = vpop.permute.xlu0 %1281
      %1283 = vrot.lane.b32.xlu0 %v390, 16
      %v1284 = vpop.permute.xlu0 %1283
      %1285 = vrot.lane.b32.xlu0 %v391, 16
      %v1286 = vpop.permute.xlu0 %1285
      %1287 = vrot.lane.b32.xlu0 %v392, 16
      %v1288 = vpop.permute.xlu0 %1287
      %1289 = vrot.lane.b32.xlu0 %v393, 16
      %v1290 = vpop.permute.xlu0 %1289
      %1291 = vrot.lane.b32.xlu0 %v394, 16
      %v1292 = vpop.permute.xlu0 %1291
      %1293 = vrot.lane.b32.xlu0 %v395, 16
      %v1294 = vpop.permute.xlu0 %1293
      %1295 = vrot.lane.b32.xlu0 %v396, 16
      %v1296 = vpop.permute.xlu0 %1295
      %1297 = vrot.lane.b32.xlu0 %v397, 16
      %v1298 = vpop.permute.xlu0 %1297
      %1299 = vrot.lane.b32.xlu0 %v398, 16
      %v1300 = vpop.permute.xlu0 %1299
      %1301 = vrot.lane.b32.xlu0 %v399, 16
      %v1302 = vpop.permute.xlu0 %1301
      %1303 = vrot.lane.b32.xlu0 %v400, 16
      %v1304 = vpop.permute.xlu0 %1303
      %1305 = vrot.lane.b32.xlu0 %v401, 16
      %v1306 = vpop.permute.xlu0 %1305
      %1307 = vrot.lane.b32.xlu0 %v402, 16
      %v1308 = vpop.permute.xlu0 %1307
      %1309 = vrot.lane.b32.xlu0 %v403, 16
      %v1310 = vpop.permute.xlu0 %1309
      %1311 = vrot.lane.b32.xlu0 %v404, 16
      %v1312 = vpop.permute.xlu0 %1311
      %1313 = vrot.lane.b32.xlu0 %v405, 16
      %v1314 = vpop.permute.xlu0 %1313
      %1315 = vrot.lane.b32.xlu0 %v406, 16
      %v1316 = vpop.permute.xlu0 %1315
      %1317 = vrot.lane.b32.xlu0 %v407, 16
      %v1318 = vpop.permute.xlu0 %1317
      %1319 = vrot.lane.b32.xlu0 %v408, 16
      %v1320 = vpop.permute.xlu0 %1319
      %1321 = vrot.lane.b32.xlu0 %v409, 16
      %v1322 = vpop.permute.xlu0 %1321
      %1323 = vrot.lane.b32.xlu0 %v410, 16
      %v1324 = vpop.permute.xlu0 %1323
      %1325 = vrot.lane.b32.xlu0 %v411, 16
      %v1326 = vpop.permute.xlu0 %1325
      %1327 = vrot.lane.b32.xlu0 %v412, 16
      %v1328 = vpop.permute.xlu0 %1327
      %1329 = vrot.lane.b32.xlu0 %v413, 16
      %v1330 = vpop.permute.xlu0 %1329
      %1331 = vrot.lane.b32.xlu0 %v414, 16
      %v1332 = vpop.permute.xlu0 %1331
      %1333 = vrot.lane.b32.xlu0 %v415, 16
      %v1334 = vpop.permute.xlu0 %1333
      %1335 = vrot.lane.b32.xlu0 %v416, 16
      %v1336 = vpop.permute.xlu0 %1335
      %1433 = vrot.lane.b32.xlu0 %v419, 20
      %v1434 = vpop.permute.xlu0 %1433
      %1435 = vrot.lane.b32.xlu0 %v420, 20
      %v1436 = vpop.permute.xlu0 %1435
      %1437 = vrot.lane.b32.xlu0 %v421, 20
      %v1438 = vpop.permute.xlu0 %1437
      %1439 = vrot.lane.b32.xlu0 %v422, 20
      %v1440 = vpop.permute.xlu0 %1439
      %1441 = vrot.lane.b32.xlu0 %v423, 20
      %v1442 = vpop.permute.xlu0 %1441
      %1443 = vrot.lane.b32.xlu0 %v424, 20
      %v1444 = vpop.permute.xlu0 %1443
      %1445 = vrot.lane.b32.xlu0 %v425, 20
      %v1446 = vpop.permute.xlu0 %1445
      %1447 = vrot.lane.b32.xlu0 %v426, 20
      %v1448 = vpop.permute.xlu0 %1447
      %1449 = vrot.lane.b32.xlu0 %v427, 20
      %v1450 = vpop.permute.xlu0 %1449
      %1451 = vrot.lane.b32.xlu0 %v428, 20
      %v1452 = vpop.permute.xlu0 %1451
      %1453 = vrot.lane.b32.xlu0 %v429, 20
      %v1454 = vpop.permute.xlu0 %1453
      %1455 = vrot.lane.b32.xlu0 %v430, 20
      %v1456 = vpop.permute.xlu0 %1455
      %1457 = vrot.lane.b32.xlu0 %v431, 20
      %v1458 = vpop.permute.xlu0 %1457
      %1459 = vrot.lane.b32.xlu0 %v432, 20
      %v1460 = vpop.permute.xlu0 %1459
      %1461 = vrot.lane.b32.xlu0 %v433, 20
      %v1462 = vpop.permute.xlu0 %1461
      %1463 = vrot.lane.b32.xlu0 %v434, 20
      %v1464 = vpop.permute.xlu0 %1463
      %1465 = vrot.lane.b32.xlu0 %v435, 20
      %v1466 = vpop.permute.xlu0 %1465
      %1467 = vrot.lane.b32.xlu0 %v436, 20
      %v1468 = vpop.permute.xlu0 %1467
      %1469 = vrot.lane.b32.xlu0 %v437, 20
      %v1470 = vpop.permute.xlu0 %1469
      %1471 = vrot.lane.b32.xlu0 %v438, 20
      %v1472 = vpop.permute.xlu0 %1471
      %1473 = vrot.lane.b32.xlu0 %v439, 20
      %v1474 = vpop.permute.xlu0 %1473
      %1475 = vrot.lane.b32.xlu0 %v440, 20
      %v1476 = vpop.permute.xlu0 %1475
      %1477 = vrot.lane.b32.xlu0 %v441, 20
      %v1478 = vpop.permute.xlu0 %1477
      %1479 = vrot.lane.b32.xlu0 %v442, 20
      %v1480 = vpop.permute.xlu0 %1479
      %1481 = vrot.lane.b32.xlu0 %v443, 20
      %v1482 = vpop.permute.xlu0 %1481
      %1483 = vrot.lane.b32.xlu0 %v444, 20
      %v1484 = vpop.permute.xlu0 %1483
      %1485 = vrot.lane.b32.xlu0 %v445, 20
      %v1486 = vpop.permute.xlu0 %1485
      %1487 = vrot.lane.b32.xlu0 %v446, 20
      %v1488 = vpop.permute.xlu0 %1487
      %1489 = vrot.lane.b32.xlu0 %v447, 20
      %v1490 = vpop.permute.xlu0 %1489
      %1491 = vrot.lane.b32.xlu0 %v448, 20
      %v1492 = vpop.permute.xlu0 %1491
      %1493 = vrot.lane.b32.xlu0 %v449, 20
      %v1494 = vpop.permute.xlu0 %1493
      %1495 = vrot.lane.b32.xlu0 %v450, 20
      %v1496 = vpop.permute.xlu0 %1495
      %1497 = vrot.lane.b32.xlu0 %v451, 20
      %v1498 = vpop.permute.xlu0 %1497
      %1499 = vrot.lane.b32.xlu0 %v452, 20
      %v1500 = vpop.permute.xlu0 %1499
      %1501 = vrot.lane.b32.xlu0 %v453, 20
      %v1502 = vpop.permute.xlu0 %1501
      %1503 = vrot.lane.b32.xlu0 %v454, 20
      %v1504 = vpop.permute.xlu0 %1503
      %1505 = vrot.lane.b32.xlu0 %v455, 20
      %v1506 = vpop.permute.xlu0 %1505
      %1507 = vrot.lane.b32.xlu0 %v456, 20
      %v1508 = vpop.permute.xlu0 %1507
      %1509 = vrot.lane.b32.xlu0 %v457, 20
      %v1510 = vpop.permute.xlu0 %1509
      %1511 = vrot.lane.b32.xlu0 %v458, 20
      %v1512 = vpop.permute.xlu0 %1511
      %1513 = vrot.lane.b32.xlu0 %v459, 20
      %v1514 = vpop.permute.xlu0 %1513
      %1515 = vrot.lane.b32.xlu0 %v460, 20
      %v1516 = vpop.permute.xlu0 %1515
      %1517 = vrot.lane.b32.xlu0 %v461, 20
      %v1518 = vpop.permute.xlu0 %1517
      %1519 = vrot.lane.b32.xlu0 %v462, 20
      %v1520 = vpop.permute.xlu0 %1519
      %1521 = vrot.lane.b32.xlu0 %v463, 20
      %v1522 = vpop.permute.xlu0 %1521
      %1523 = vrot.lane.b32.xlu0 %v464, 20
      %v1524 = vpop.permute.xlu0 %1523
      %1525 = vrot.lane.b32.xlu0 %v465, 20
      %v1526 = vpop.permute.xlu0 %1525
      %1527 = vrot.lane.b32.xlu0 %v466, 20
      %v1528 = vpop.permute.xlu0 %1527
      %1625 = vrot.lane.b32.xlu0 %v469, 24
      %v1626 = vpop.permute.xlu0 %1625
      %1627 = vrot.lane.b32.xlu0 %v470, 24
      %v1628 = vpop.permute.xlu0 %1627
      %1629 = vrot.lane.b32.xlu0 %v471, 24
      %v1630 = vpop.permute.xlu0 %1629
      %1631 = vrot.lane.b32.xlu0 %v472, 24
      %v1632 = vpop.permute.xlu0 %1631
      %1633 = vrot.lane.b32.xlu0 %v473, 24
      %v1634 = vpop.permute.xlu0 %1633
      %1635 = vrot.lane.b32.xlu0 %v474, 24
      %v1636 = vpop.permute.xlu0 %1635
      %1637 = vrot.lane.b32.xlu0 %v475, 24
      %v1638 = vpop.permute.xlu0 %1637
      %1639 = vrot.lane.b32.xlu0 %v476, 24
      %v1640 = vpop.permute.xlu0 %1639
      %1641 = vrot.lane.b32.xlu0 %v477, 24
      %v1642 = vpop.permute.xlu0 %1641
      %1643 = vrot.lane.b32.xlu0 %v478, 24
      %v1644 = vpop.permute.xlu0 %1643
      %1645 = vrot.lane.b32.xlu0 %v479, 24
      %v1646 = vpop.permute.xlu0 %1645
      %1647 = vrot.lane.b32.xlu0 %v480, 24
      %v1648 = vpop.permute.xlu0 %1647
      %1649 = vrot.lane.b32.xlu0 %v481, 24
      %v1650 = vpop.permute.xlu0 %1649
      %1651 = vrot.lane.b32.xlu0 %v482, 24
      %v1652 = vpop.permute.xlu0 %1651
      %1653 = vrot.lane.b32.xlu0 %v483, 24
      %v1654 = vpop.permute.xlu0 %1653
      %1655 = vrot.lane.b32.xlu0 %v484, 24
      %v1656 = vpop.permute.xlu0 %1655
      %1657 = vrot.lane.b32.xlu0 %v485, 24
      %v1658 = vpop.permute.xlu0 %1657
      %1659 = vrot.lane.b32.xlu0 %v486, 24
      %v1660 = vpop.permute.xlu0 %1659
      %1661 = vrot.lane.b32.xlu0 %v487, 24
      %v1662 = vpop.permute.xlu0 %1661
      %1663 = vrot.lane.b32.xlu0 %v488, 24
      %v1664 = vpop.permute.xlu0 %1663
      %1665 = vrot.lane.b32.xlu0 %v489, 24
      %v1666 = vpop.permute.xlu0 %1665
      %1667 = vrot.lane.b32.xlu0 %v490, 24
      %v1668 = vpop.permute.xlu0 %1667
      %1669 = vrot.lane.b32.xlu0 %v491, 24
      %v1670 = vpop.permute.xlu0 %1669
      %1671 = vrot.lane.b32.xlu0 %v492, 24
      %v1672 = vpop.permute.xlu0 %1671
      %1673 = vrot.lane.b32.xlu0 %v493, 24
      %v1674 = vpop.permute.xlu0 %1673
      %1675 = vrot.lane.b32.xlu0 %v494, 24
      %v1676 = vpop.permute.xlu0 %1675
      %1677 = vrot.lane.b32.xlu0 %v495, 24
      %v1678 = vpop.permute.xlu0 %1677
      %1679 = vrot.lane.b32.xlu0 %v496, 24
      %v1680 = vpop.permute.xlu0 %1679
      %1681 = vrot.lane.b32.xlu0 %v497, 24
      %v1682 = vpop.permute.xlu0 %1681
      %1683 = vrot.lane.b32.xlu0 %v498, 24
      %v1684 = vpop.permute.xlu0 %1683
      %1685 = vrot.lane.b32.xlu0 %v499, 24
      %v1686 = vpop.permute.xlu0 %1685
      %1687 = vrot.lane.b32.xlu0 %v500, 24
      %v1688 = vpop.permute.xlu0 %1687
      %1689 = vrot.lane.b32.xlu0 %v501, 24
      %v1690 = vpop.permute.xlu0 %1689
      %1691 = vrot.lane.b32.xlu0 %v502, 24
      %v1692 = vpop.permute.xlu0 %1691
      %1693 = vrot.lane.b32.xlu0 %v503, 24
      %v1694 = vpop.permute.xlu0 %1693
      %1695 = vrot.lane.b32.xlu0 %v504, 24
      %v1696 = vpop.permute.xlu0 %1695
      %1697 = vrot.lane.b32.xlu0 %v505, 24
      %v1698 = vpop.permute.xlu0 %1697
      %1699 = vrot.lane.b32.xlu0 %v506, 24
      %v1700 = vpop.permute.xlu0 %1699
      %1701 = vrot.lane.b32.xlu0 %v507, 24
      %v1702 = vpop.permute.xlu0 %1701
      %1703 = vrot.lane.b32.xlu0 %v508, 24
      %v1704 = vpop.permute.xlu0 %1703
      %1705 = vrot.lane.b32.xlu0 %v509, 24
      %v1706 = vpop.permute.xlu0 %1705
      %1707 = vrot.lane.b32.xlu0 %v510, 24
      %v1708 = vpop.permute.xlu0 %1707
      %1709 = vrot.lane.b32.xlu0 %v511, 24
      %v1710 = vpop.permute.xlu0 %1709
      %1711 = vrot.lane.b32.xlu0 %v512, 24
      %v1712 = vpop.permute.xlu0 %1711
      %1713 = vrot.lane.b32.xlu0 %v513, 24
      %v1714 = vpop.permute.xlu0 %1713
      %1715 = vrot.lane.b32.xlu0 %v514, 24
      %v1716 = vpop.permute.xlu0 %1715
      %1717 = vrot.lane.b32.xlu0 %v515, 24
      %v1718 = vpop.permute.xlu0 %1717
      %1719 = vrot.lane.b32.xlu0 %v516, 24
      %v1720 = vpop.permute.xlu0 %1719
      %1817 = vrot.lane.b32.xlu0 %v519, 28
      %v1818 = vpop.permute.xlu0 %1817
      %1819 = vrot.lane.b32.xlu0 %v520, 28
      %v1820 = vpop.permute.xlu0 %1819
      %1821 = vrot.lane.b32.xlu0 %v521, 28
      %v1822 = vpop.permute.xlu0 %1821
      %1823 = vrot.lane.b32.xlu0 %v522, 28
      %v1824 = vpop.permute.xlu0 %1823
      %1825 = vrot.lane.b32.xlu0 %v523, 28
      %v1826 = vpop.permute.xlu0 %1825
      %1827 = vrot.lane.b32.xlu0 %v524, 28
      %v1828 = vpop.permute.xlu0 %1827
      %1829 = vrot.lane.b32.xlu0 %v525, 28
      %v1830 = vpop.permute.xlu0 %1829
      %1831 = vrot.lane.b32.xlu0 %v526, 28
      %v1832 = vpop.permute.xlu0 %1831
      %1833 = vrot.lane.b32.xlu0 %v527, 28
      %v1834 = vpop.permute.xlu0 %1833
      %1835 = vrot.lane.b32.xlu0 %v528, 28
      %v1836 = vpop.permute.xlu0 %1835
      %1837 = vrot.lane.b32.xlu0 %v529, 28
      %v1838 = vpop.permute.xlu0 %1837
      %1839 = vrot.lane.b32.xlu0 %v530, 28
      %v1840 = vpop.permute.xlu0 %1839
      %1841 = vrot.lane.b32.xlu0 %v531, 28
      %v1842 = vpop.permute.xlu0 %1841
      %1843 = vrot.lane.b32.xlu0 %v532, 28
      %v1844 = vpop.permute.xlu0 %1843
      %1845 = vrot.lane.b32.xlu0 %v533, 28
      %v1846 = vpop.permute.xlu0 %1845
      %1847 = vrot.lane.b32.xlu0 %v534, 28
      %v1848 = vpop.permute.xlu0 %1847
      %1849 = vrot.lane.b32.xlu0 %v535, 28
      %v1850 = vpop.permute.xlu0 %1849
      %1851 = vrot.lane.b32.xlu0 %v536, 28
      %v1852 = vpop.permute.xlu0 %1851
      %1853 = vrot.lane.b32.xlu0 %v537, 28
      %v1854 = vpop.permute.xlu0 %1853
      %1855 = vrot.lane.b32.xlu0 %v538, 28
      %v1856 = vpop.permute.xlu0 %1855
      %1857 = vrot.lane.b32.xlu0 %v539, 28
      %v1858 = vpop.permute.xlu0 %1857
      %1859 = vrot.lane.b32.xlu0 %v540, 28
      %v1860 = vpop.permute.xlu0 %1859
      %1861 = vrot.lane.b32.xlu0 %v541, 28
      %v1862 = vpop.permute.xlu0 %1861
      %1863 = vrot.lane.b32.xlu0 %v542, 28
      %v1864 = vpop.permute.xlu0 %1863
      %1865 = vrot.lane.b32.xlu0 %v543, 28
      %v1866 = vpop.permute.xlu0 %1865
      %1867 = vrot.lane.b32.xlu0 %v544, 28
      %v1868 = vpop.permute.xlu0 %1867
      %1869 = vrot.lane.b32.xlu0 %v545, 28
      %v1870 = vpop.permute.xlu0 %1869
      %1871 = vrot.lane.b32.xlu0 %v546, 28
      %v1872 = vpop.permute.xlu0 %1871
      %1873 = vrot.lane.b32.xlu0 %v547, 28
      %v1874 = vpop.permute.xlu0 %1873
      %1875 = vrot.lane.b32.xlu0 %v548, 28
      %v1876 = vpop.permute.xlu0 %1875
      %1877 = vrot.lane.b32.xlu0 %v549, 28
      %v1878 = vpop.permute.xlu0 %1877
      %1879 = vrot.lane.b32.xlu0 %v550, 28
      %v1880 = vpop.permute.xlu0 %1879
      %1881 = vrot.lane.b32.xlu0 %v551, 28
      %v1882 = vpop.permute.xlu0 %1881
      %1883 = vrot.lane.b32.xlu0 %v552, 28
      %v1884 = vpop.permute.xlu0 %1883
      %1885 = vrot.lane.b32.xlu0 %v553, 28
      %v1886 = vpop.permute.xlu0 %1885
      %1887 = vrot.lane.b32.xlu0 %v554, 28
      %v1888 = vpop.permute.xlu0 %1887
      %1889 = vrot.lane.b32.xlu0 %v555, 28
      %v1890 = vpop.permute.xlu0 %1889
      %1891 = vrot.lane.b32.xlu0 %v556, 28
      %v1892 = vpop.permute.xlu0 %1891
      %1893 = vrot.lane.b32.xlu0 %v557, 28
      %v1894 = vpop.permute.xlu0 %1893
      %1895 = vrot.lane.b32.xlu0 %v558, 28
      %v1896 = vpop.permute.xlu0 %1895
      %1897 = vrot.lane.b32.xlu0 %v559, 28
      %v1898 = vpop.permute.xlu0 %1897
      %1899 = vrot.lane.b32.xlu0 %v560, 28
      %v1900 = vpop.permute.xlu0 %1899
      %1901 = vrot.lane.b32.xlu0 %v561, 28
      %v1902 = vpop.permute.xlu0 %1901
      %1903 = vrot.lane.b32.xlu0 %v562, 28
      %v1904 = vpop.permute.xlu0 %1903
      %1905 = vrot.lane.b32.xlu0 %v563, 28
      %v1906 = vpop.permute.xlu0 %1905
      %1907 = vrot.lane.b32.xlu0 %v564, 28
      %v1908 = vpop.permute.xlu0 %1907
      %1909 = vrot.lane.b32.xlu0 %v565, 28
      %v1910 = vpop.permute.xlu0 %1909
      %1911 = vrot.lane.b32.xlu0 %v566, 28
      %v1912 = vpop.permute.xlu0 %1911
      %2009 = vrot.lane.b32.xlu0 %v569, 32
      %v2010 = vpop.permute.xlu0 %2009
      %2011 = vrot.lane.b32.xlu0 %v570, 32
      %v2012 = vpop.permute.xlu0 %2011
      %2013 = vrot.lane.b32.xlu0 %v571, 32
      %v2014 = vpop.permute.xlu0 %2013
      %2015 = vrot.lane.b32.xlu0 %v572, 32
      %v2016 = vpop.permute.xlu0 %2015
      %2017 = vrot.lane.b32.xlu0 %v573, 32
      %v2018 = vpop.permute.xlu0 %2017
      %2019 = vrot.lane.b32.xlu0 %v574, 32
      %v2020 = vpop.permute.xlu0 %2019
      %2021 = vrot.lane.b32.xlu0 %v575, 32
      %v2022 = vpop.permute.xlu0 %2021
      %2023 = vrot.lane.b32.xlu0 %v576, 32
      %v2024 = vpop.permute.xlu0 %2023
      %2025 = vrot.lane.b32.xlu0 %v577, 32
      %v2026 = vpop.permute.xlu0 %2025
      %2027 = vrot.lane.b32.xlu0 %v578, 32
      %v2028 = vpop.permute.xlu0 %2027
      %2029 = vrot.lane.b32.xlu0 %v579, 32
      %v2030 = vpop.permute.xlu0 %2029
      %2031 = vrot.lane.b32.xlu0 %v580, 32
      %v2032 = vpop.permute.xlu0 %2031
      %2033 = vrot.lane.b32.xlu0 %v581, 32
      %v2034 = vpop.permute.xlu0 %2033
      %2035 = vrot.lane.b32.xlu0 %v582, 32
      %v2036 = vpop.permute.xlu0 %2035
      %2037 = vrot.lane.b32.xlu0 %v583, 32
      %v2038 = vpop.permute.xlu0 %2037
      %2039 = vrot.lane.b32.xlu0 %v584, 32
      %v2040 = vpop.permute.xlu0 %2039
      %2041 = vrot.lane.b32.xlu0 %v585, 32
      %v2042 = vpop.permute.xlu0 %2041
      %2043 = vrot.lane.b32.xlu0 %v586, 32
      %v2044 = vpop.permute.xlu0 %2043
      %2045 = vrot.lane.b32.xlu0 %v587, 32
      %v2046 = vpop.permute.xlu0 %2045
      %2047 = vrot.lane.b32.xlu0 %v588, 32
      %v2048 = vpop.permute.xlu0 %2047
      %2049 = vrot.lane.b32.xlu0 %v589, 32
      %v2050 = vpop.permute.xlu0 %2049
      %2051 = vrot.lane.b32.xlu0 %v590, 32
      %v2052 = vpop.permute.xlu0 %2051
      %2053 = vrot.lane.b32.xlu0 %v591, 32
      %v2054 = vpop.permute.xlu0 %2053
      %2055 = vrot.lane.b32.xlu0 %v592, 32
      %v2056 = vpop.permute.xlu0 %2055
      %2057 = vrot.lane.b32.xlu0 %v593, 32
      %v2058 = vpop.permute.xlu0 %2057
      %2059 = vrot.lane.b32.xlu0 %v594, 32
      %v2060 = vpop.permute.xlu0 %2059
      %2061 = vrot.lane.b32.xlu0 %v595, 32
      %v2062 = vpop.permute.xlu0 %2061
      %2063 = vrot.lane.b32.xlu0 %v596, 32
      %v2064 = vpop.permute.xlu0 %2063
      %2065 = vrot.lane.b32.xlu0 %v597, 32
      %v2066 = vpop.permute.xlu0 %2065
      %2067 = vrot.lane.b32.xlu0 %v598, 32
      %v2068 = vpop.permute.xlu0 %2067
      %2069 = vrot.lane.b32.xlu0 %v599, 32
      %v2070 = vpop.permute.xlu0 %2069
      %2071 = vrot.lane.b32.xlu0 %v600, 32
      %v2072 = vpop.permute.xlu0 %2071
      %2073 = vrot.lane.b32.xlu0 %v601, 32
      %v2074 = vpop.permute.xlu0 %2073
      %2075 = vrot.lane.b32.xlu0 %v602, 32
      %v2076 = vpop.permute.xlu0 %2075
      %2077 = vrot.lane.b32.xlu0 %v603, 32
      %v2078 = vpop.permute.xlu0 %2077
      %2079 = vrot.lane.b32.xlu0 %v604, 32
      %v2080 = vpop.permute.xlu0 %2079
      %2081 = vrot.lane.b32.xlu0 %v605, 32
      %v2082 = vpop.permute.xlu0 %2081
      %2083 = vrot.lane.b32.xlu0 %v606, 32
      %v2084 = vpop.permute.xlu0 %2083
      %2085 = vrot.lane.b32.xlu0 %v607, 32
      %v2086 = vpop.permute.xlu0 %2085
      %2087 = vrot.lane.b32.xlu0 %v608, 32
      %v2088 = vpop.permute.xlu0 %2087
      %2089 = vrot.lane.b32.xlu0 %v609, 32
      %v2090 = vpop.permute.xlu0 %2089
      %2091 = vrot.lane.b32.xlu0 %v610, 32
      %v2092 = vpop.permute.xlu0 %2091
      %2093 = vrot.lane.b32.xlu0 %v611, 32
      %v2094 = vpop.permute.xlu0 %2093
      %2095 = vrot.lane.b32.xlu0 %v612, 32
      %v2096 = vpop.permute.xlu0 %2095
      %2097 = vrot.lane.b32.xlu0 %v613, 32
      %v2098 = vpop.permute.xlu0 %2097
      %2099 = vrot.lane.b32.xlu0 %v614, 32
      %v2100 = vpop.permute.xlu0 %2099
      %2101 = vrot.lane.b32.xlu0 %v615, 32
      %v2102 = vpop.permute.xlu0 %2101
      %2103 = vrot.lane.b32.xlu0 %v616, 32
      %v2104 = vpop.permute.xlu0 %2103
      %vm2153 = vcmask 31744
      %v2154 = vsel %vm2153, %v169, %v666
      %v2155 = vsel %vm2153, %v170, %v668
      %v2156 = vsel %vm2153, %v171, %v670
      %v2157 = vsel %vm2153, %v172, %v672
      %v2158 = vsel %vm2153, %v173, %v674
      %v2159 = vsel %vm2153, %v174, %v676
      %v2160 = vsel %vm2153, %v175, %v678
      %v2161 = vsel %vm2153, %v176, %v680
      %v2162 = vsel %vm2153, %v177, %v682
      %v2163 = vsel %vm2153, %v178, %v684
      %v2164 = vsel %vm2153, %v179, %v686
      %v2165 = vsel %vm2153, %v180, %v688
      %v2166 = vsel %vm2153, %v181, %v690
      %v2167 = vsel %vm2153, %v182, %v692
      %v2168 = vsel %vm2153, %v183, %v694
      %v2169 = vsel %vm2153, %v184, %v696
      %v2170 = vsel %vm2153, %v185, %v698
      %v2171 = vsel %vm2153, %v186, %v700
      %v2172 = vsel %vm2153, %v187, %v702
      %v2173 = vsel %vm2153, %v188, %v704
      %v2174 = vsel %vm2153, %v189, %v706
      %v2175 = vsel %vm2153, %v190, %v708
      %v2176 = vsel %vm2153, %v191, %v710
      %v2177 = vsel %vm2153, %v192, %v712
      %v2178 = vsel %vm2153, %v193, %v714
      %v2179 = vsel %vm2153, %v194, %v716
      %v2180 = vsel %vm2153, %v195, %v718
      %v2181 = vsel %vm2153, %v196, %v720
      %v2182 = vsel %vm2153, %v197, %v722
      %v2183 = vsel %vm2153, %v198, %v724
      %v2184 = vsel %vm2153, %v199, %v726
      %v2185 = vsel %vm2153, %v200, %v728
      %v2186 = vsel %vm2153, %v201, %v730
      %v2187 = vsel %vm2153, %v202, %v732
      %v2188 = vsel %vm2153, %v203, %v734
      %v2189 = vsel %vm2153, %v204, %v736
      %v2190 = vsel %vm2153, %v205, %v738
      %v2191 = vsel %vm2153, %v206, %v740
      %v2192 = vsel %vm2153, %v207, %v742
      %v2193 = vsel %vm2153, %v208, %v744
      %v2194 = vsel %vm2153, %v209, %v746
      %v2195 = vsel %vm2153, %v210, %v748
      %v2196 = vsel %vm2153, %v211, %v750
      %v2197 = vsel %vm2153, %v212, %v752
      %v2198 = vsel %vm2153, %v213, %v754
      %v2199 = vsel %vm2153, %v214, %v756
      %v2200 = vsel %vm2153, %v215, %v758
      %v2201 = vsel %vm2153, %v216, %v760
      %vm2202 = vcmask 64512
      %v2203 = vsel %vm2202, %v2154, %v858
      %v2204 = vsel %vm2202, %v2155, %v860
      %v2205 = vsel %vm2202, %v2156, %v862
      %v2206 = vsel %vm2202, %v2157, %v864
      %v2207 = vsel %vm2202, %v2158, %v866
      %v2208 = vsel %vm2202, %v2159, %v868
      %v2209 = vsel %vm2202, %v2160, %v870
      %v2210 = vsel %vm2202, %v2161, %v872
      %v2211 = vsel %vm2202, %v2162, %v874
      %v2212 = vsel %vm2202, %v2163, %v876
      %v2213 = vsel %vm2202, %v2164, %v878
      %v2214 = vsel %vm2202, %v2165, %v880
      %v2215 = vsel %vm2202, %v2166, %v882
      %v2216 = vsel %vm2202, %v2167, %v884
      %v2217 = vsel %vm2202, %v2168, %v886
      %v2218 = vsel %vm2202, %v2169, %v888
      %v2219 = vsel %vm2202, %v2170, %v890
      %v2220 = vsel %vm2202, %v2171, %v892
      %v2221 = vsel %vm2202, %v2172, %v894
      %v2222 = vsel %vm2202, %v2173, %v896
      %v2223 = vsel %vm2202, %v2174, %v898
      %v2224 = vsel %vm2202, %v2175, %v900
      %v2225 = vsel %vm2202, %v2176, %v902
      %v2226 = vsel %vm2202, %v2177, %v904
      %v2227 = vsel %vm2202, %v2178, %v906
      %v2228 = vsel %vm2202, %v2179, %v908
      %v2229 = vsel %vm2202, %v2180, %v910
      %v2230 = vsel %vm2202, %v2181, %v912
      %v2231 = vsel %vm2202, %v2182, %v914
      %v2232 = vsel %vm2202, %v2183, %v916
      %v2233 = vsel %vm2202, %v2184, %v918
      %v2234 = vsel %vm2202, %v2185, %v920
      %v2235 = vsel %vm2202, %v2186, %v922
      %v2236 = vsel %vm2202, %v2187, %v924
      %v2237 = vsel %vm2202, %v2188, %v926
      %v2238 = vsel %vm2202, %v2189, %v928
      %v2239 = vsel %vm2202, %v2190, %v930
      %v2240 = vsel %vm2202, %v2191, %v932
      %v2241 = vsel %vm2202, %v2192, %v934
      %v2242 = vsel %vm2202, %v2193, %v936
      %v2243 = vsel %vm2202, %v2194, %v938
      %v2244 = vsel %vm2202, %v2195, %v940
      %v2245 = vsel %vm2202, %v2196, %v942
      %v2246 = vsel %vm2202, %v2197, %v944
      %v2247 = vsel %vm2202, %v2198, %v946
      %v2248 = vsel %vm2202, %v2199, %v948
      %v2249 = vsel %vm2202, %v2200, %v950
      %v2250 = vsel %vm2202, %v2201, %v952
      %vm2251 = vcmask 97280
      %v2252 = vsel %vm2251, %v2203, %v1050
      %v2253 = vsel %vm2251, %v2204, %v1052
      %v2254 = vsel %vm2251, %v2205, %v1054
      %v2255 = vsel %vm2251, %v2206, %v1056
      %v2256 = vsel %vm2251, %v2207, %v1058
      %v2257 = vsel %vm2251, %v2208, %v1060
      %v2258 = vsel %vm2251, %v2209, %v1062
      %v2259 = vsel %vm2251, %v2210, %v1064
      %v2260 = vsel %vm2251, %v2211, %v1066
      %v2261 = vsel %vm2251, %v2212, %v1068
      %v2262 = vsel %vm2251, %v2213, %v1070
      %v2263 = vsel %vm2251, %v2214, %v1072
      %v2264 = vsel %vm2251, %v2215, %v1074
      %v2265 = vsel %vm2251, %v2216, %v1076
      %v2266 = vsel %vm2251, %v2217, %v1078
      %v2267 = vsel %vm2251, %v2218, %v1080
      %v2268 = vsel %vm2251, %v2219, %v1082
      %v2269 = vsel %vm2251, %v2220, %v1084
      %v2270 = vsel %vm2251, %v2221, %v1086
      %v2271 = vsel %vm2251, %v2222, %v1088
      %v2272 = vsel %vm2251, %v2223, %v1090
      %v2273 = vsel %vm2251, %v2224, %v1092
      %v2274 = vsel %vm2251, %v2225, %v1094
      %v2275 = vsel %vm2251, %v2226, %v1096
      %v2276 = vsel %vm2251, %v2227, %v1098
      %v2277 = vsel %vm2251, %v2228, %v1100
      %v2278 = vsel %vm2251, %v2229, %v1102
      %v2279 = vsel %vm2251, %v2230, %v1104
      %v2280 = vsel %vm2251, %v2231, %v1106
      %v2281 = vsel %vm2251, %v2232, %v1108
      %v2282 = vsel %vm2251, %v2233, %v1110
      %v2283 = vsel %vm2251, %v2234, %v1112
      %v2284 = vsel %vm2251, %v2235, %v1114
      %v2285 = vsel %vm2251, %v2236, %v1116
      %v2286 = vsel %vm2251, %v2237, %v1118
      %v2287 = vsel %vm2251, %v2238, %v1120
      %v2288 = vsel %vm2251, %v2239, %v1122
      %v2289 = vsel %vm2251, %v2240, %v1124
      %v2290 = vsel %vm2251, %v2241, %v1126
      %v2291 = vsel %vm2251, %v2242, %v1128
      %v2292 = vsel %vm2251, %v2243, %v1130
      %v2293 = vsel %vm2251, %v2244, %v1132
      %v2294 = vsel %vm2251, %v2245, %v1134
      %v2295 = vsel %vm2251, %v2246, %v1136
      %v2296 = vsel %vm2251, %v2247, %v1138
      %v2297 = vsel %vm2251, %v2248, %v1140
      %v2298 = vsel %vm2251, %v2249, %v1142
      %v2299 = vsel %vm2251, %v2250, %v1144
      %vm2300 = vcmask 130048
      %v2301 = vsel %vm2300, %v2252, %v1242
      %v2302 = vsel %vm2300, %v2253, %v1244
      %v2303 = vsel %vm2300, %v2254, %v1246
      %v2304 = vsel %vm2300, %v2255, %v1248
      %v2305 = vsel %vm2300, %v2256, %v1250
      %v2306 = vsel %vm2300, %v2257, %v1252
      %v2307 = vsel %vm2300, %v2258, %v1254
      %v2308 = vsel %vm2300, %v2259, %v1256
      %v2309 = vsel %vm2300, %v2260, %v1258
      %v2310 = vsel %vm2300, %v2261, %v1260
      %v2311 = vsel %vm2300, %v2262, %v1262
      %v2312 = vsel %vm2300, %v2263, %v1264
      %v2313 = vsel %vm2300, %v2264, %v1266
      %v2314 = vsel %vm2300, %v2265, %v1268
      %v2315 = vsel %vm2300, %v2266, %v1270
      %v2316 = vsel %vm2300, %v2267, %v1272
      %v2317 = vsel %vm2300, %v2268, %v1274
      %v2318 = vsel %vm2300, %v2269, %v1276
      %v2319 = vsel %vm2300, %v2270, %v1278
      %v2320 = vsel %vm2300, %v2271, %v1280
      %v2321 = vsel %vm2300, %v2272, %v1282
      %v2322 = vsel %vm2300, %v2273, %v1284
      %v2323 = vsel %vm2300, %v2274, %v1286
      %v2324 = vsel %vm2300, %v2275, %v1288
      %v2325 = vsel %vm2300, %v2276, %v1290
      %v2326 = vsel %vm2300, %v2277, %v1292
      %v2327 = vsel %vm2300, %v2278, %v1294
      %v2328 = vsel %vm2300, %v2279, %v1296
      %v2329 = vsel %vm2300, %v2280, %v1298
      %v2330 = vsel %vm2300, %v2281, %v1300
      %v2331 = vsel %vm2300, %v2282, %v1302
      %v2332 = vsel %vm2300, %v2283, %v1304
      %v2333 = vsel %vm2300, %v2284, %v1306
      %v2334 = vsel %vm2300, %v2285, %v1308
      %v2335 = vsel %vm2300, %v2286, %v1310
      %v2336 = vsel %vm2300, %v2287, %v1312
      %v2337 = vsel %vm2300, %v2288, %v1314
      %v2338 = vsel %vm2300, %v2289, %v1316
      %v2339 = vsel %vm2300, %v2290, %v1318
      %v2340 = vsel %vm2300, %v2291, %v1320
      %v2341 = vsel %vm2300, %v2292, %v1322
      %v2342 = vsel %vm2300, %v2293, %v1324
      %v2343 = vsel %vm2300, %v2294, %v1326
      %v2344 = vsel %vm2300, %v2295, %v1328
      %v2345 = vsel %vm2300, %v2296, %v1330
      %v2346 = vsel %vm2300, %v2297, %v1332
      %v2347 = vsel %vm2300, %v2298, %v1334
      %v2348 = vsel %vm2300, %v2299, %v1336
      %vm2349 = vcmask 162816
      %v2350 = vsel %vm2349, %v2301, %v1434
      %v2351 = vsel %vm2349, %v2302, %v1436
      %v2352 = vsel %vm2349, %v2303, %v1438
      %v2353 = vsel %vm2349, %v2304, %v1440
      %v2354 = vsel %vm2349, %v2305, %v1442
      %v2355 = vsel %vm2349, %v2306, %v1444
      %v2356 = vsel %vm2349, %v2307, %v1446
      %v2357 = vsel %vm2349, %v2308, %v1448
      %v2358 = vsel %vm2349, %v2309, %v1450
      %v2359 = vsel %vm2349, %v2310, %v1452
      %v2360 = vsel %vm2349, %v2311, %v1454
      %v2361 = vsel %vm2349, %v2312, %v1456
      %v2362 = vsel %vm2349, %v2313, %v1458
      %v2363 = vsel %vm2349, %v2314, %v1460
      %v2364 = vsel %vm2349, %v2315, %v1462
      %v2365 = vsel %vm2349, %v2316, %v1464
      %v2366 = vsel %vm2349, %v2317, %v1466
      %v2367 = vsel %vm2349, %v2318, %v1468
      %v2368 = vsel %vm2349, %v2319, %v1470
      %v2369 = vsel %vm2349, %v2320, %v1472
      %v2370 = vsel %vm2349, %v2321, %v1474
      %v2371 = vsel %vm2349, %v2322, %v1476
      %v2372 = vsel %vm2349, %v2323, %v1478
      %v2373 = vsel %vm2349, %v2324, %v1480
      %v2374 = vsel %vm2349, %v2325, %v1482
      %v2375 = vsel %vm2349, %v2326, %v1484
      %v2376 = vsel %vm2349, %v2327, %v1486
      %v2377 = vsel %vm2349, %v2328, %v1488
      %v2378 = vsel %vm2349, %v2329, %v1490
      %v2379 = vsel %vm2349, %v2330, %v1492
      %v2380 = vsel %vm2349, %v2331, %v1494
      %v2381 = vsel %vm2349, %v2332, %v1496
      %v2382 = vsel %vm2349, %v2333, %v1498
      %v2383 = vsel %vm2349, %v2334, %v1500
      %v2384 = vsel %vm2349, %v2335, %v1502
      %v2385 = vsel %vm2349, %v2336, %v1504
      %v2386 = vsel %vm2349, %v2337, %v1506
      %v2387 = vsel %vm2349, %v2338, %v1508
      %v2388 = vsel %vm2349, %v2339, %v1510
      %v2389 = vsel %vm2349, %v2340, %v1512
      %v2390 = vsel %vm2349, %v2341, %v1514
      %v2391 = vsel %vm2349, %v2342, %v1516
      %v2392 = vsel %vm2349, %v2343, %v1518
      %v2393 = vsel %vm2349, %v2344, %v1520
      %v2394 = vsel %vm2349, %v2345, %v1522
      %v2395 = vsel %vm2349, %v2346, %v1524
      %v2396 = vsel %vm2349, %v2347, %v1526
      %v2397 = vsel %vm2349, %v2348, %v1528
      %vm2398 = vcmask 195584
      %v2399 = vsel %vm2398, %v2350, %v1626
      %v2400 = vsel %vm2398, %v2351, %v1628
      %v2401 = vsel %vm2398, %v2352, %v1630
      %v2402 = vsel %vm2398, %v2353, %v1632
      %v2403 = vsel %vm2398, %v2354, %v1634
      %v2404 = vsel %vm2398, %v2355, %v1636
      %v2405 = vsel %vm2398, %v2356, %v1638
      %v2406 = vsel %vm2398, %v2357, %v1640
      %v2407 = vsel %vm2398, %v2358, %v1642
      %v2408 = vsel %vm2398, %v2359, %v1644
      %v2409 = vsel %vm2398, %v2360, %v1646
      %v2410 = vsel %vm2398, %v2361, %v1648
      %v2411 = vsel %vm2398, %v2362, %v1650
      %v2412 = vsel %vm2398, %v2363, %v1652
      %v2413 = vsel %vm2398, %v2364, %v1654
      %v2414 = vsel %vm2398, %v2365, %v1656
      %v2415 = vsel %vm2398, %v2366, %v1658
      %v2416 = vsel %vm2398, %v2367, %v1660
      %v2417 = vsel %vm2398, %v2368, %v1662
      %v2418 = vsel %vm2398, %v2369, %v1664
      %v2419 = vsel %vm2398, %v2370, %v1666
      %v2420 = vsel %vm2398, %v2371, %v1668
      %v2421 = vsel %vm2398, %v2372, %v1670
      %v2422 = vsel %vm2398, %v2373, %v1672
      %v2423 = vsel %vm2398, %v2374, %v1674
      %v2424 = vsel %vm2398, %v2375, %v1676
      %v2425 = vsel %vm2398, %v2376, %v1678
      %v2426 = vsel %vm2398, %v2377, %v1680
      %v2427 = vsel %vm2398, %v2378, %v1682
      %v2428 = vsel %vm2398, %v2379, %v1684
      %v2429 = vsel %vm2398, %v2380, %v1686
      %v2430 = vsel %vm2398, %v2381, %v1688
      %v2431 = vsel %vm2398, %v2382, %v1690
      %v2432 = vsel %vm2398, %v2383, %v1692
      %v2433 = vsel %vm2398, %v2384, %v1694
      %v2434 = vsel %vm2398, %v2385, %v1696
      %v2435 = vsel %vm2398, %v2386, %v1698
      %v2436 = vsel %vm2398, %v2387, %v1700
      %v2437 = vsel %vm2398, %v2388, %v1702
      %v2438 = vsel %vm2398, %v2389, %v1704
      %v2439 = vsel %vm2398, %v2390, %v1706
      %v2440 = vsel %vm2398, %v2391, %v1708
      %v2441 = vsel %vm2398, %v2392, %v1710
      %v2442 = vsel %vm2398, %v2393, %v1712
      %v2443 = vsel %vm2398, %v2394, %v1714
      %v2444 = vsel %vm2398, %v2395, %v1716
      %v2445 = vsel %vm2398, %v2396, %v1718
      %v2446 = vsel %vm2398, %v2397, %v1720
      %vm2447 = vcmask 228352
      %v2448 = vsel %vm2447, %v2399, %v1818
      %v2449 = vsel %vm2447, %v2400, %v1820
      %v2450 = vsel %vm2447, %v2401, %v1822
      %v2451 = vsel %vm2447, %v2402, %v1824
      %v2452 = vsel %vm2447, %v2403, %v1826
      %v2453 = vsel %vm2447, %v2404, %v1828
      %v2454 = vsel %vm2447, %v2405, %v1830
      %v2455 = vsel %vm2447, %v2406, %v1832
      %v2456 = vsel %vm2447, %v2407, %v1834
      %v2457 = vsel %vm2447, %v2408, %v1836
      %v2458 = vsel %vm2447, %v2409, %v1838
      %v2459 = vsel %vm2447, %v2410, %v1840
      %v2460 = vsel %vm2447, %v2411, %v1842
      %v2461 = vsel %vm2447, %v2412, %v1844
      %v2462 = vsel %vm2447, %v2413, %v1846
      %v2463 = vsel %vm2447, %v2414, %v1848
      %v2464 = vsel %vm2447, %v2415, %v1850
      %v2465 = vsel %vm2447, %v2416, %v1852
      %v2466 = vsel %vm2447, %v2417, %v1854
      %v2467 = vsel %vm2447, %v2418, %v1856
      %v2468 = vsel %vm2447, %v2419, %v1858
      %v2469 = vsel %vm2447, %v2420, %v1860
      %v2470 = vsel %vm2447, %v2421, %v1862
      %v2471 = vsel %vm2447, %v2422, %v1864
      %v2472 = vsel %vm2447, %v2423, %v1866
      %v2473 = vsel %vm2447, %v2424, %v1868
      %v2474 = vsel %vm2447, %v2425, %v1870
      %v2475 = vsel %vm2447, %v2426, %v1872
      %v2476 = vsel %vm2447, %v2427, %v1874
      %v2477 = vsel %vm2447, %v2428, %v1876
      %v2478 = vsel %vm2447, %v2429, %v1878
      %v2479 = vsel %vm2447, %v2430, %v1880
      %v2480 = vsel %vm2447, %v2431, %v1882
      %v2481 = vsel %vm2447, %v2432, %v1884
      %v2482 = vsel %vm2447, %v2433, %v1886
      %v2483 = vsel %vm2447, %v2434, %v1888
      %v2484 = vsel %vm2447, %v2435, %v1890
      %v2485 = vsel %vm2447, %v2436, %v1892
      %v2486 = vsel %vm2447, %v2437, %v1894
      %v2487 = vsel %vm2447, %v2438, %v1896
      %v2488 = vsel %vm2447, %v2439, %v1898
      %v2489 = vsel %vm2447, %v2440, %v1900
      %v2490 = vsel %vm2447, %v2441, %v1902
      %v2491 = vsel %vm2447, %v2442, %v1904
      %v2492 = vsel %vm2447, %v2443, %v1906
      %v2493 = vsel %vm2447, %v2444, %v1908
      %v2494 = vsel %vm2447, %v2445, %v1910
      %v2495 = vsel %vm2447, %v2446, %v1912
      %vm2496 = vcmask 261120
      %v2497 = vsel %vm2496, %v2448, %v2010
      %v2498 = vsel %vm2496, %v2449, %v2012
      %v2499 = vsel %vm2496, %v2450, %v2014
      %v2500 = vsel %vm2496, %v2451, %v2016
      %v2501 = vsel %vm2496, %v2452, %v2018
      %v2502 = vsel %vm2496, %v2453, %v2020
      %v2503 = vsel %vm2496, %v2454, %v2022
      %v2504 = vsel %vm2496, %v2455, %v2024
      %v2505 = vsel %vm2496, %v2456, %v2026
      %v2506 = vsel %vm2496, %v2457, %v2028
      %v2507 = vsel %vm2496, %v2458, %v2030
      %v2508 = vsel %vm2496, %v2459, %v2032
      %v2509 = vsel %vm2496, %v2460, %v2034
      %v2510 = vsel %vm2496, %v2461, %v2036
      %v2511 = vsel %vm2496, %v2462, %v2038
      %v2512 = vsel %vm2496, %v2463, %v2040
      %v2513 = vsel %vm2496, %v2464, %v2042
      %v2514 = vsel %vm2496, %v2465, %v2044
      %v2515 = vsel %vm2496, %v2466, %v2046
      %v2516 = vsel %vm2496, %v2467, %v2048
      %v2517 = vsel %vm2496, %v2468, %v2050
      %v2518 = vsel %vm2496, %v2469, %v2052
      %v2519 = vsel %vm2496, %v2470, %v2054
      %v2520 = vsel %vm2496, %v2471, %v2056
      %v2521 = vsel %vm2496, %v2472, %v2058
      %v2522 = vsel %vm2496, %v2473, %v2060
      %v2523 = vsel %vm2496, %v2474, %v2062
      %v2524 = vsel %vm2496, %v2475, %v2064
      %v2525 = vsel %vm2496, %v2476, %v2066
      %v2526 = vsel %vm2496, %v2477, %v2068
      %v2527 = vsel %vm2496, %v2478, %v2070
      %v2528 = vsel %vm2496, %v2479, %v2072
      %v2529 = vsel %vm2496, %v2480, %v2074
      %v2530 = vsel %vm2496, %v2481, %v2076
      %v2531 = vsel %vm2496, %v2482, %v2078
      %v2532 = vsel %vm2496, %v2483, %v2080
      %v2533 = vsel %vm2496, %v2484, %v2082
      %v2534 = vsel %vm2496, %v2485, %v2084
      %v2535 = vsel %vm2496, %v2486, %v2086
      %v2536 = vsel %vm2496, %v2487, %v2088
      %v2537 = vsel %vm2496, %v2488, %v2090
      %v2538 = vsel %vm2496, %v2489, %v2092
      %v2539 = vsel %vm2496, %v2490, %v2094
      %v2540 = vsel %vm2496, %v2491, %v2096
      %v2541 = vsel %vm2496, %v2492, %v2098
      %v2542 = vsel %vm2496, %v2493, %v2100
      %v2543 = vsel %vm2496, %v2494, %v2102
      %v2544 = vsel %vm2496, %v2495, %v2104
      %v2545 = vld [vmem:[%s1] sm:$0xff]
      %v2546 = vld [vmem:[%s1 + $0x8] sm:$0xff]
      %v2547 = vld [vmem:[%s1 + $0x10] sm:$0xff]
      %v2548 = vld [vmem:[%s1 + $0x18] sm:$0xff]
      %v2549 = vld [vmem:[%s1 + $0x20] sm:$0xf]
      %vm2550 = vcmask 293888
      %v2552 = vsel %vm2550, %v2497, 0
      %v2555 = vsel %vm2550, %v2498, 0
      %v2558 = vsel %vm2550, %v2499, 0
      %v2561 = vsel %vm2550, %v2500, 0
      %v2564 = vsel %vm2550, %v2501, 0
      %v2567 = vsel %vm2550, %v2502, 0
      %v2570 = vsel %vm2550, %v2503, 0
      %v2573 = vsel %vm2550, %v2504, 0
      %v2576 = vsel %vm2550, %v2505, 0
      %v2579 = vsel %vm2550, %v2506, 0
      %v2582 = vsel %vm2550, %v2507, 0
      %v2585 = vsel %vm2550, %v2508, 0
      %v2588 = vsel %vm2550, %v2509, 0
      %v2591 = vsel %vm2550, %v2510, 0
      %v2594 = vsel %vm2550, %v2511, 0
      %v2597 = vsel %vm2550, %v2512, 0
      %v2600 = vsel %vm2550, %v2513, 0
      %v2603 = vsel %vm2550, %v2514, 0
      %v2606 = vsel %vm2550, %v2515, 0
      %v2609 = vsel %vm2550, %v2516, 0
      %v2612 = vsel %vm2550, %v2517, 0
      %v2615 = vsel %vm2550, %v2518, 0
      %v2618 = vsel %vm2550, %v2519, 0
      %v2621 = vsel %vm2550, %v2520, 0
      %v2624 = vsel %vm2550, %v2521, 0
      %v2627 = vsel %vm2550, %v2522, 0
      %v2630 = vsel %vm2550, %v2523, 0
      %v2633 = vsel %vm2550, %v2524, 0
      %v2636 = vsel %vm2550, %v2525, 0
      %v2639 = vsel %vm2550, %v2526, 0
      %v2642 = vsel %vm2550, %v2527, 0
      %v2645 = vsel %vm2550, %v2528, 0
      %v2648 = vsel %vm2550, %v2529, 0
      %v2651 = vsel %vm2550, %v2530, 0
      %v2654 = vsel %vm2550, %v2531, 0
      %v2657 = vsel %vm2550, %v2532, 0
      %v2660 = vsel %vm2550, %v2533, 0
      %v2663 = vsel %vm2550, %v2534, 0
      %v2666 = vsel %vm2550, %v2535, 0
      %v2669 = vsel %vm2550, %v2536, 0
      %v2672 = vsel %vm2550, %v2537, 0
      %v2675 = vsel %vm2550, %v2538, 0
      %v2678 = vsel %vm2550, %v2539, 0
      %v2681 = vsel %vm2550, %v2540, 0
      %v2684 = vsel %vm2550, %v2541, 0
      %v2687 = vsel %vm2550, %v2542, 0
      %v2690 = vsel %vm2550, %v2543, 0
      %v2693 = vsel %vm2550, %v2544, 0
      %vm2695 = vcmask 1043456
      %v2697 = vsel %vm2695, %v2549, 0
      %2699 = vmatpush.msra.mxu0 0.0
      %2700 = vmatpush.msra.mxu0 0.0
      %2701 = vmatpush.msra.mxu0 0.0
      %2702 = vmatpush.msra.mxu0 0.0
      %2703 = vmatpush.msra.mxu0 0.0
      %2704 = vmatpush.msra.mxu0 0.0
      %2705 = vmatpush.msra.mxu0 0.0
      %2706 = vmatpush.msra.mxu0 0.0
      %2707 = vmatpush.msra.mxu0 0.0
      %2708 = vmatpush.msra.mxu0 0.0
      %2709 = vmatpush.msra.mxu0 0.0
      %2710 = vmatpush.msra.mxu0 %v2697
      %2711 = vmatpush.msra.mxu0 %v2548
      %2712 = vmatpush.msra.mxu0 %v2547
      %2713 = vmatpush.msra.mxu0 %v2546
      %2714 = vmatpush.msra.mxu0 %v2545
      %2715 = vmatmul.f32.gmra.mxu0 %v2552
      %v2716 = vpop.f32.mrf.mxu0
      %v2717 = vadd.f32 0.0, %v2716
      %2718 = vmatmul.f32.gmra.mxu0 %v2555
      %v2719 = vpop.f32.mrf.mxu0
      %v2720 = vadd.f32 0.0, %v2719
      %2721 = vmatmul.f32.gmra.mxu0 %v2558
      %v2722 = vpop.f32.mrf.mxu0
      %v2723 = vadd.f32 0.0, %v2722
      %2724 = vmatmul.f32.gmra.mxu0 %v2561
      %v2725 = vpop.f32.mrf.mxu0
      %v2726 = vadd.f32 0.0, %v2725
      %2727 = vmatmul.f32.gmra.mxu0 %v2564
      %v2728 = vpop.f32.mrf.mxu0
      %v2729 = vadd.f32 0.0, %v2728
      %2730 = vmatmul.f32.gmra.mxu0 %v2567
      %v2731 = vpop.f32.mrf.mxu0
      %v2732 = vadd.f32 0.0, %v2731
      %2733 = vmatmul.f32.gmra.mxu0 %v2570
      %v2734 = vpop.f32.mrf.mxu0
      %v2735 = vadd.f32 0.0, %v2734
      %2736 = vmatmul.f32.gmra.mxu0 %v2573
      %v2737 = vpop.f32.mrf.mxu0
      %v2738 = vadd.f32 0.0, %v2737
      %2739 = vmatmul.f32.gmra.mxu0 %v2576
      %v2740 = vpop.f32.mrf.mxu0
      %v2741 = vadd.f32 0.0, %v2740
      %2742 = vmatmul.f32.gmra.mxu0 %v2579
      %v2743 = vpop.f32.mrf.mxu0
      %v2744 = vadd.f32 0.0, %v2743
      %2745 = vmatmul.f32.gmra.mxu0 %v2582
      %v2746 = vpop.f32.mrf.mxu0
      %v2747 = vadd.f32 0.0, %v2746
      %2748 = vmatmul.f32.gmra.mxu0 %v2585
      %v2749 = vpop.f32.mrf.mxu0
      %v2750 = vadd.f32 0.0, %v2749
      %2751 = vmatmul.f32.gmra.mxu0 %v2588
      %v2752 = vpop.f32.mrf.mxu0
      %v2753 = vadd.f32 0.0, %v2752
      %2754 = vmatmul.f32.gmra.mxu0 %v2591
      %v2755 = vpop.f32.mrf.mxu0
      %v2756 = vadd.f32 0.0, %v2755
      %2757 = vmatmul.f32.gmra.mxu0 %v2594
      %v2758 = vpop.f32.mrf.mxu0
      %v2759 = vadd.f32 0.0, %v2758
      %2760 = vmatmul.f32.gmra.mxu0 %v2597
      %v2761 = vpop.f32.mrf.mxu0
      %v2762 = vadd.f32 0.0, %v2761
      %2763 = vmatmul.f32.gmra.mxu0 %v2600
      %v2764 = vpop.f32.mrf.mxu0
      %v2765 = vadd.f32 0.0, %v2764
      %2766 = vmatmul.f32.gmra.mxu0 %v2603
      %v2767 = vpop.f32.mrf.mxu0
      %v2768 = vadd.f32 0.0, %v2767
      %2769 = vmatmul.f32.gmra.mxu0 %v2606
      %v2770 = vpop.f32.mrf.mxu0
      %v2771 = vadd.f32 0.0, %v2770
      %2772 = vmatmul.f32.gmra.mxu0 %v2609
      %v2773 = vpop.f32.mrf.mxu0
      %v2774 = vadd.f32 0.0, %v2773
      %2775 = vmatmul.f32.gmra.mxu0 %v2612
      %v2776 = vpop.f32.mrf.mxu0
      %v2777 = vadd.f32 0.0, %v2776
      %2778 = vmatmul.f32.gmra.mxu0 %v2615
      %v2779 = vpop.f32.mrf.mxu0
      %v2780 = vadd.f32 0.0, %v2779
      %2781 = vmatmul.f32.gmra.mxu0 %v2618
      %v2782 = vpop.f32.mrf.mxu0
      %v2783 = vadd.f32 0.0, %v2782
      %2784 = vmatmul.f32.gmra.mxu0 %v2621
      %v2785 = vpop.f32.mrf.mxu0
      %v2786 = vadd.f32 0.0, %v2785
      %2787 = vmatmul.f32.gmra.mxu0 %v2624
      %v2788 = vpop.f32.mrf.mxu0
      %v2789 = vadd.f32 0.0, %v2788
      %2790 = vmatmul.f32.gmra.mxu0 %v2627
      %v2791 = vpop.f32.mrf.mxu0
      %v2792 = vadd.f32 0.0, %v2791
      %2793 = vmatmul.f32.gmra.mxu0 %v2630
      %v2794 = vpop.f32.mrf.mxu0
      %v2795 = vadd.f32 0.0, %v2794
      %2796 = vmatmul.f32.gmra.mxu0 %v2633
      %v2797 = vpop.f32.mrf.mxu0
      %v2798 = vadd.f32 0.0, %v2797
      %2799 = vmatmul.f32.gmra.mxu0 %v2636
      %v2800 = vpop.f32.mrf.mxu0
      %v2801 = vadd.f32 0.0, %v2800
      %2802 = vmatmul.f32.gmra.mxu0 %v2639
      %v2803 = vpop.f32.mrf.mxu0
      %v2804 = vadd.f32 0.0, %v2803
      %2805 = vmatmul.f32.gmra.mxu0 %v2642
      %v2806 = vpop.f32.mrf.mxu0
      %v2807 = vadd.f32 0.0, %v2806
      %2808 = vmatmul.f32.gmra.mxu0 %v2645
      %v2809 = vpop.f32.mrf.mxu0
      %v2810 = vadd.f32 0.0, %v2809
      %2811 = vmatmul.f32.gmra.mxu0 %v2648
      %v2812 = vpop.f32.mrf.mxu0
      %v2813 = vadd.f32 0.0, %v2812
      %2814 = vmatmul.f32.gmra.mxu0 %v2651
      %v2815 = vpop.f32.mrf.mxu0
      %v2816 = vadd.f32 0.0, %v2815
      %2817 = vmatmul.f32.gmra.mxu0 %v2654
      %v2818 = vpop.f32.mrf.mxu0
      %v2819 = vadd.f32 0.0, %v2818
      %2820 = vmatmul.f32.gmra.mxu0 %v2657
      %v2821 = vpop.f32.mrf.mxu0
      %v2822 = vadd.f32 0.0, %v2821
      %2823 = vmatmul.f32.gmra.mxu0 %v2660
      %v2824 = vpop.f32.mrf.mxu0
      %v2825 = vadd.f32 0.0, %v2824
      %2826 = vmatmul.f32.gmra.mxu0 %v2663
      %v2827 = vpop.f32.mrf.mxu0
      %v2828 = vadd.f32 0.0, %v2827
      %2829 = vmatmul.f32.gmra.mxu0 %v2666
      %v2830 = vpop.f32.mrf.mxu0
      %v2831 = vadd.f32 0.0, %v2830
      %2832 = vmatmul.f32.gmra.mxu0 %v2669
      %v2833 = vpop.f32.mrf.mxu0
      %v2834 = vadd.f32 0.0, %v2833
      %2835 = vmatmul.f32.gmra.mxu0 %v2672
      %v2836 = vpop.f32.mrf.mxu0
      %v2837 = vadd.f32 0.0, %v2836
      %2838 = vmatmul.f32.gmra.mxu0 %v2675
      %v2839 = vpop.f32.mrf.mxu0
      %v2840 = vadd.f32 0.0, %v2839
      %2841 = vmatmul.f32.gmra.mxu0 %v2678
      %v2842 = vpop.f32.mrf.mxu0
      %v2843 = vadd.f32 0.0, %v2842
      %2844 = vmatmul.f32.gmra.mxu0 %v2681
      %v2845 = vpop.f32.mrf.mxu0
      %v2846 = vadd.f32 0.0, %v2845
      %2847 = vmatmul.f32.gmra.mxu0 %v2684
      %v2848 = vpop.f32.mrf.mxu0
      %v2849 = vadd.f32 0.0, %v2848
      %2850 = vmatmul.f32.gmra.mxu0 %v2687
      %v2851 = vpop.f32.mrf.mxu0
      %v2852 = vadd.f32 0.0, %v2851
      %2853 = vmatmul.f32.gmra.mxu0 %v2690
      %v2854 = vpop.f32.mrf.mxu0
      %v2855 = vadd.f32 0.0, %v2854
      %2856 = vmatmul.f32.gmra.mxu0 %v2693
      %v2857 = vpop.f32.mrf.mxu0
      %v2858 = vadd.f32 0.0, %v2857
      %2859 = vdwg.mxu0
      %2860 = vst [vmem:[%s165] sm:$0xff] %v2717
      %2861 = vst [vmem:[%s165 + $0x8] sm:$0xff] %v2720
      %2862 = vst [vmem:[%s165 + $0x10] sm:$0xff] %v2723
      %2863 = vst [vmem:[%s165 + $0x18] sm:$0xff] %v2726
      %2864 = vst [vmem:[%s165 + $0x20] sm:$0xff] %v2729
      %2865 = vst [vmem:[%s165 + $0x28] sm:$0xff] %v2732
      %2866 = vst [vmem:[%s165 + $0x30] sm:$0xff] %v2735
      %2867 = vst [vmem:[%s165 + $0x38] sm:$0xff] %v2738
      %2868 = vst [vmem:[%s165 + $0x40] sm:$0xff] %v2741
      %2869 = vst [vmem:[%s165 + $0x48] sm:$0xff] %v2744
      %2870 = vst [vmem:[%s165 + $0x50] sm:$0xff] %v2747
      %2871 = vst [vmem:[%s165 + $0x58] sm:$0xff] %v2750
      %2872 = vst [vmem:[%s165 + $0x60] sm:$0xff] %v2753
      %2873 = vst [vmem:[%s165 + $0x68] sm:$0xff] %v2756
      %2874 = vst [vmem:[%s165 + $0x70] sm:$0xff] %v2759
      %2875 = vst [vmem:[%s165 + $0x78] sm:$0xff] %v2762
      %2876 = vst [vmem:[%s165 + $0x80] sm:$0xff] %v2765
      %2877 = vst [vmem:[%s165 + $0x88] sm:$0xff] %v2768
      %2878 = vst [vmem:[%s165 + $0x90] sm:$0xff] %v2771
      %2879 = vst [vmem:[%s165 + $0x98] sm:$0xff] %v2774
      %2880 = vst [vmem:[%s165 + $0xa0] sm:$0xff] %v2777
      %2881 = vst [vmem:[%s165 + $0xa8] sm:$0xff] %v2780
      %2882 = vst [vmem:[%s165 + $0xb0] sm:$0xff] %v2783
      %2883 = vst [vmem:[%s165 + $0xb8] sm:$0xff] %v2786
      %2884 = vst [vmem:[%s165 + $0xc0] sm:$0xff] %v2789
      %2885 = vst [vmem:[%s165 + $0xc8] sm:$0xff] %v2792
      %2886 = vst [vmem:[%s165 + $0xd0] sm:$0xff] %v2795
      %2887 = vst [vmem:[%s165 + $0xd8] sm:$0xff] %v2798
      %2888 = vst [vmem:[%s165 + $0xe0] sm:$0xff] %v2801
      %2889 = vst [vmem:[%s165 + $0xe8] sm:$0xff] %v2804
      %2890 = vst [vmem:[%s165 + $0xf0] sm:$0xff] %v2807
      %2891 = vst [vmem:[%s165 + $0xf8] sm:$0xff] %v2810
      %2892 = vst [vmem:[%s165 + $0x100] sm:$0xff] %v2813
      %2893 = vst [vmem:[%s165 + $0x108] sm:$0xff] %v2816
      %2894 = vst [vmem:[%s165 + $0x110] sm:$0xff] %v2819
      %2895 = vst [vmem:[%s165 + $0x118] sm:$0xff] %v2822
      %2896 = vst [vmem:[%s165 + $0x120] sm:$0xff] %v2825
      %2897 = vst [vmem:[%s165 + $0x128] sm:$0xff] %v2828
      %2898 = vst [vmem:[%s165 + $0x130] sm:$0xff] %v2831
      %2899 = vst [vmem:[%s165 + $0x138] sm:$0xff] %v2834
      %2900 = vst [vmem:[%s165 + $0x140] sm:$0xff] %v2837
      %2901 = vst [vmem:[%s165 + $0x148] sm:$0xff] %v2840
      %2902 = vst [vmem:[%s165 + $0x150] sm:$0xff] %v2843
      %2903 = vst [vmem:[%s165 + $0x158] sm:$0xff] %v2846
      %2904 = vst [vmem:[%s165 + $0x160] sm:$0xff] %v2849
      %2905 = vst [vmem:[%s165 + $0x168] sm:$0xff] %v2852
      %2906 = vst [vmem:[%s165 + $0x170] sm:$0xff] %v2855
      %2907 = vst [vmem:[%s165 + $0x178] sm:$0xff] %v2858
      %s2908 = smul.u32 48, %s18
      %p2909 = scmp.lt.s32.totalorder %s17, 1
      %s2910 = scalar_select %p2909, %s17, 1
      %p2911 = scmp.lt.s32.totalorder %s2908, 47
      %s2912 = scalar_select %p2911, %s2908, 47
      %s2913 = smul.addr %s2910, 48
      %s2914 = sadd.s32 %s2912, %s2913
      %s2915 = smul.addr %s2914, 8
      %s2916 = scalar_lea.vmem %s2, %s2915
      // Predicated region
      $region29: #{svd_conv2d_forward.1} parent=27 // pred_check
        %p2917 = pneg %p92
      $region30: #{svd_conv2d_forward.1} parent=27 // pred_check_branch
        %2919 = sbr.rel (%p2917) target = $region32
      $region31: #{svd_conv2d_forward.1} parent=27 // pred_region
        %s2920 = smul.u32 48, %s18
      $region32: #{svd_conv2d_forward.1} parent=27 // pred_fallthru
        _
    $region28: #{svd_conv2d_forward.1} parent=5 // pred_fallthru
      _
    %p2921 = scmp.le.s32.totalorder 2, %s8
    // Predicated region
    $region33: #{svd_conv2d_forward.1} parent=5 // pred_check
      %p2922 = pneg %p2921
    $region34: #{svd_conv2d_forward.1} parent=5 // pred_check_branch
      %2924 = sbr.rel (%p2922) target = $region36
    $region35: #{svd_conv2d_forward.1} parent=5 // pred_region
      %s2925 = ssub.s32 %s8, 2
      // Predicated region
      $region37: #{svd_conv2d_forward.1} parent=35 // pred_check
        %p2926 = pneg %p98
      $region38: #{svd_conv2d_forward.1} parent=35 // pred_check_branch
        %2928 = sbr.rel (%p2926) target = $region40
      $region39: #{svd_conv2d_forward.1} parent=35 // pred_region
        %s2929 = smul.u32 48, %s20
        %p2930 = scmp.lt.s32.totalorder %s19, 1
        %s2931 = scalar_select %p2930, %s19, 1
        %p2932 = scmp.lt.s32.totalorder %s2929, 47
        %s2933 = scalar_select %p2932, %s2929, 47
        %s2934 = smul.addr %s2931, 48
        %s2935 = sadd.s32 %s2933, %s2934
        %s2936 = smul.addr %s2935, 8
        %s2937 = scalar_lea.vmem %s2, %s2936
      $region40: #{svd_conv2d_forward.1} parent=35 // pred_fallthru
        _
    $region36: #{svd_conv2d_forward.1} parent=5 // pred_fallthru
      _
  $region6: #{svd_conv2d_forward.1} parent=0 // loop_footer
    %s12 = sadd.s32 1, %s8
  $region7: #{svd_conv2d_forward.1} parent=0 // loop_footer_branch
    %7 = sbr.rel target = $region3
  $region8: #{svd_conv2d_forward.1} parent=0 // loop_exit
    _

</llo_original>
